<compile_context>
chip_gen: v5e
topology: v5e:2x2
jax: 0.10.0
libtpu: 0.0.40
codegen_flags: <defaults>
</compile_context>

<pallas_src>
import inspect

import jax
import jax.numpy as jnp
from jax.experimental import pallas as pl
from jax.experimental.pallas import tpu as pltpu

IN_DIM = 768
HID_DIM = 512
PATH_DIM = 32          # true output width of the last Linear
OUT_PAD = 128          # lane-dense padded output width (sliced in the wrapper)


def _round_up(n, m):
    return ((n + m - 1) // m) * m


def _supports_pipeline_mode():
    try:
        return (hasattr(pl, "Buffered")
                and "pipeline_mode" in inspect.signature(pl.BlockSpec).parameters)
    except (TypeError, ValueError):
        return False


# Single resident buffer for constant (weight/bias) blocks when available.
_RESIDENT_KW = {"pipeline_mode": pl.Buffered(1)} if _supports_pipeline_mode() else {}


def _const_spec(shape):
    return pl.BlockSpec(shape, lambda i: (0, 0), **_RESIDENT_KW)


def _mlp_kernel(x_ref, w1_ref, b1_ref, w2_ref, b2_ref, w3_ref, b3_ref, o_ref):
    # Layer 1: [tm, 768] @ [768, 512] (bf16 x bf16 -> f32 acc) + bias, ReLU in f32
    x = x_ref[...].astype(jnp.bfloat16)          # no-op when x arrives as bf16
    h1 = jnp.dot(x, w1_ref[...], preferred_element_type=jnp.float32)
    h1 = jnp.maximum(h1 + b1_ref[...], 0.0)
    # Layer 2: [tm, 512] @ [512, 512]
    h2 = jnp.dot(h1.astype(jnp.bfloat16), w2_ref[...],
                 preferred_element_type=jnp.float32)
    h2 = jnp.maximum(h2 + b2_ref[...], 0.0)
    # Layer 3: [tm, 512] @ [512, 128] (zero-padded from 32 -> 128 lanes)
    h3 = jnp.dot(h2.astype(jnp.bfloat16), w3_ref[...],
                 preferred_element_type=jnp.float32)
    h3 = jnp.maximum(h3 + b3_ref[...], 0.0)
    o_ref[...] = h3.astype(o_ref.dtype)          # bf16, lane-dense (128) store


def feature_extractor_forward(x, params, *, tm=1024):
    """x: [B, 768] backbone features (bf16 preferred, f32 accepted).

    Returns [B, PATH_DIM] f32 features.

    params: (w1[768,512] bf16, b1[1,512] f32,
             w2[512,512] bf16, b2[1,512] f32,
             w3[512,128] bf16 zero-padded, b3[1,128] f32 zero-padded)
    """
    w1, b1, w2, b2, w3, b3 = params
    B, F = x.shape
    assert F == IN_DIM

    # Pad only to the next sublane multiple (<= 7 rows), and only when needed.
    b8 = _round_up(B, 8)
    if b8 != B:
        x = jnp.pad(x, ((0, b8 - B), (0, 0)))

    # Big tiles amortize the ~0.35 us fixed per-grid-step overhead; keep >= 2
    # grid steps so v7x's two TensorCores both get work and input/output DMA
    # overlaps compute.  The tile-level tail is a partial block (no padding).
    tm_eff = min(tm, _round_up(pl.cdiv(b8, 2), 8))
    grid = (pl.cdiv(b8, tm_eff),)

    out_padded = pl.pallas_call(
        _mlp_kernel,
        out_shape=jax.ShapeDtypeStruct((b8, OUT_PAD), jnp.bfloat16),
        grid_spec=pltpu.PrefetchScalarGridSpec(
            num_scalar_prefetch=0,
            grid=grid,
            in_specs=[
                pl.BlockSpec((tm_eff, IN_DIM), lambda i: (i, 0)),  # x tile
                _const_spec((IN_DIM, HID_DIM)),                    # W1 (resident)
                _const_spec((1, HID_DIM)),                         # b1
                _const_spec((HID_DIM, HID_DIM)),                   # W2
                _const_spec((1, HID_DIM)),                         # b2
                _const_spec((HID_DIM, OUT_PAD)),                   # W3 (padded)
                _const_spec((1, OUT_PAD)),                         # b3 (padded)
            ],
            out_specs=pl.BlockSpec((tm_eff, OUT_PAD), lambda i: (i, 0)),
        ),
        compiler_params=pltpu.CompilerParams(
            dimension_semantics=("parallel",),
            vmem_limit_bytes=32 * 1024 * 1024),
    )(x, w1, b1, w2, b2, w3, b3)

    # Drop sublane padding / partial-block garbage rows and the 96 zero lanes
    # of the padded last layer; cast the tiny [B, 32] slab back to f32.
    return out_padded[:B, :PATH_DIM].astype(jnp.float32)


def init_params(key, path_dim=PATH_DIM):
    """Deterministic synthetic init matching nn.Linear shapes.

    Weights are stored pre-transposed as [in, out] in bfloat16; the last
    layer's weight/bias are zero-padded from `path_dim` to OUT_PAD lanes.
    """
    k1, k2, k3, k4, k5, k6 = jax.random.split(key, 6)

    def lin(kw, kb, fan_in, fan_out):
        bound = 1.0 / jnp.sqrt(fan_in)
        w = jax.random.uniform(kw, (fan_in, fan_out), jnp.float32, -bound, bound)
        b = jax.random.uniform(kb, (1, fan_out), jnp.float32, -bound, bound)
        return w, b

    w1, b1 = lin(k1, k2, IN_DIM, HID_DIM)
    w2, b2 = lin(k3, k4, HID_DIM, HID_DIM)
    w3, b3 = lin(k5, k6, HID_DIM, path_dim)

    # Pad final layer to a lane-dense 128-wide output.
    w3p = jnp.zeros((HID_DIM, OUT_PAD), jnp.float32).at[:, :path_dim].set(w3)
    b3p = jnp.zeros((1, OUT_PAD), jnp.float32).at[:, :path_dim].set(b3)

    return (w1.astype(jnp.bfloat16), b1,
            w2.astype(jnp.bfloat16), b2,
            w3p.astype(jnp.bfloat16), b3p)


def reference_forward(x, params):
    """Pure-JAX reference with identical mixed precision (bf16 matmul, f32 acc,
    bf16 output rounding)."""
    w1, b1, w2, b2, w3, b3 = params

    def layer(h, w, b):
        y = jnp.dot(h.astype(jnp.bfloat16), w, preferred_element_type=jnp.float32)
        return jnp.maximum(y + b, 0.0)

    h = layer(x, w1, b1)
    h = layer(h, w2, b2)
    h = layer(h, w3, b3)
    return h.astype(jnp.bfloat16)[:, :PATH_DIM].astype(jnp.float32)


if __name__ == "__main__":
    key = jax.random.PRNGKey(0)
    kx, kp = jax.random.split(key)
    params = init_params(kp)

    # B=12: non-multiple-of-8 batch -> exercises sublane pad + 2-step grid.
    # B=24: multiple of 8, grid of 2 with a partial last block (tail handling).
    for B in (12, 24):
        # Backbone (ctranspath, head=Identity) output features, cast to bf16 at
        # the producer (per perf review) so the kernel's x stream is 2 B/elem.
        x = jax.random.normal(kx, (B, IN_DIM), jnp.float32).astype(jnp.bfloat16)

        out = feature_extractor_forward(x, params)
        out = jax.block_until_ready(out)

        ref = reference_forward(x, params)
        assert out.shape == (B, PATH_DIM)
        assert jnp.allclose(out, ref, atol=2e-2, rtol=2e-2), (
            f"mismatch at B={B}: max abs err "
            f"{jnp.max(jnp.abs(out - ref))}")

    print("KERNEL_OK")
</pallas_src>

<mosaic_0001>
module attributes {stable_mosaic.version = 11 : i64} {
  func.func @_mlp_kernel(%arg0: i32, %arg1: memref<8x768xbf16, #tpu.memory_space<vmem>>, %arg2: memref<768x512xbf16, #tpu.memory_space<vmem>>, %arg3: memref<1x512xf32, #tpu.memory_space<vmem>>, %arg4: memref<512x512xbf16, #tpu.memory_space<vmem>>, %arg5: memref<1x512xf32, #tpu.memory_space<vmem>>, %arg6: memref<512x128xbf16, #tpu.memory_space<vmem>>, %arg7: memref<1x128xf32, #tpu.memory_space<vmem>>, %arg8: memref<8x128xbf16, #tpu.memory_space<vmem>>) attributes {dimension_semantics = [#tpu.dimension_semantics<parallel>], iteration_bounds = array<i64: 2>, scalar_prefetch = 0 : i64, scratch_operands = 0 : i64, tpu.core_type = #tpu.core_type<tc>, window_params = [{transform_indices = @transform_0, window_bounds = array<i64: 8, 768>}, {pipeline_mode = #tpu.pipeline_mode<synchronous>, transform_indices = @transform_1, window_bounds = array<i64: 768, 512>}, {pipeline_mode = #tpu.pipeline_mode<synchronous>, transform_indices = @transform_2, window_bounds = array<i64: 1, 512>}, {pipeline_mode = #tpu.pipeline_mode<synchronous>, transform_indices = @transform_3, window_bounds = array<i64: 512, 512>}, {pipeline_mode = #tpu.pipeline_mode<synchronous>, transform_indices = @transform_4, window_bounds = array<i64: 1, 512>}, {pipeline_mode = #tpu.pipeline_mode<synchronous>, transform_indices = @transform_5, window_bounds = array<i64: 512, 128>}, {pipeline_mode = #tpu.pipeline_mode<synchronous>, transform_indices = @transform_6, window_bounds = array<i64: 1, 128>}, {transform_indices = @transform_7, window_bounds = array<i64: 8, 128>}]} {
    %c0 = arith.constant 0 : index
    %c0_0 = arith.constant 0 : index
    %0 = vector.load %arg1[%c0, %c0_0] : memref<8x768xbf16, #tpu.memory_space<vmem>>, vector<8x768xbf16>
    %c0_1 = arith.constant 0 : index
    %c0_2 = arith.constant 0 : index
    %1 = vector.load %arg2[%c0_1, %c0_2] : memref<768x512xbf16, #tpu.memory_space<vmem>>, vector<768x512xbf16>
    %cst = arith.constant dense<0.000000e+00> : vector<8x512xf32>
    %2 = tpu.matmul %0, %1, %cst {dimension_numbers = #tpu.dot_dimension_numbers<[1], [0], [0], [1], [0, 0, 1, 1], [], []>} : vector<8x768xbf16>, vector<768x512xbf16>, vector<8x512xf32> -> vector<8x512xf32>
    %c0_3 = arith.constant 0 : index
    %c0_4 = arith.constant 0 : index
    %3 = vector.load %arg3[%c0_3, %c0_4] : memref<1x512xf32, #tpu.memory_space<vmem>>, vector<1x512xf32>
    %4 = vector.broadcast %3 : vector<1x512xf32> to vector<8x512xf32>
    %5 = arith.addf %2, %4 : vector<8x512xf32>
    %cst_5 = arith.constant 0.000000e+00 : f32
    %6 = vector.broadcast %cst_5 : f32 to vector<8x512xf32>
    %7 = arith.maximumf %5, %6 : vector<8x512xf32>
    %8 = arith.truncf %7 : vector<8x512xf32> to vector<8x512xbf16>
    %c0_6 = arith.constant 0 : index
    %c0_7 = arith.constant 0 : index
    %9 = vector.load %arg4[%c0_6, %c0_7] : memref<512x512xbf16, #tpu.memory_space<vmem>>, vector<512x512xbf16>
    %cst_8 = arith.constant dense<0.000000e+00> : vector<8x512xf32>
    %10 = tpu.matmul %8, %9, %cst_8 {dimension_numbers = #tpu.dot_dimension_numbers<[1], [0], [0], [1], [0, 0, 1, 1], [], []>} : vector<8x512xbf16>, vector<512x512xbf16>, vector<8x512xf32> -> vector<8x512xf32>
    %c0_9 = arith.constant 0 : index
    %c0_10 = arith.constant 0 : index
    %11 = vector.load %arg5[%c0_9, %c0_10] : memref<1x512xf32, #tpu.memory_space<vmem>>, vector<1x512xf32>
    %12 = vector.broadcast %11 : vector<1x512xf32> to vector<8x512xf32>
    %13 = arith.addf %10, %12 : vector<8x512xf32>
    %cst_11 = arith.constant 0.000000e+00 : f32
    %14 = vector.broadcast %cst_11 : f32 to vector<8x512xf32>
    %15 = arith.maximumf %13, %14 : vector<8x512xf32>
    %16 = arith.truncf %15 : vector<8x512xf32> to vector<8x512xbf16>
    %c0_12 = arith.constant 0 : index
    %c0_13 = arith.constant 0 : index
    %17 = vector.load %arg6[%c0_12, %c0_13] : memref<512x128xbf16, #tpu.memory_space<vmem>>, vector<512x128xbf16>
    %cst_14 = arith.constant dense<0.000000e+00> : vector<8x128xf32>
    %18 = tpu.matmul %16, %17, %cst_14 {dimension_numbers = #tpu.dot_dimension_numbers<[1], [0], [0], [1], [0, 0, 1, 1], [], []>} : vector<8x512xbf16>, vector<512x128xbf16>, vector<8x128xf32> -> vector<8x128xf32>
    %c0_15 = arith.constant 0 : index
    %c0_16 = arith.constant 0 : index
    %19 = vector.load %arg7[%c0_15, %c0_16] : memref<1x128xf32, #tpu.memory_space<vmem>>, vector<1x128xf32>
    %20 = vector.broadcast %19 : vector<1x128xf32> to vector<8x128xf32>
    %21 = arith.addf %18, %20 : vector<8x128xf32>
    %cst_17 = arith.constant 0.000000e+00 : f32
    %22 = vector.broadcast %cst_17 : f32 to vector<8x128xf32>
    %23 = arith.maximumf %21, %22 : vector<8x128xf32>
    %24 = arith.truncf %23 : vector<8x128xf32> to vector<8x128xbf16>
    %c0_18 = arith.constant 0 : index
    %c0_19 = arith.constant 0 : index
    %25 = vector.load %arg8[%c0_18, %c0_19] : memref<8x128xbf16, #tpu.memory_space<vmem>>, vector<8x128xbf16>
    tpu.vector_store %arg8[%c0_18, %c0_19], %24 {strides = array<i32>} : memref<8x128xbf16, #tpu.memory_space<vmem>>, vector<8x128xbf16>,
    return
  }
  func.func @transform_0(%arg0: i32) -> (i32, i32) {
    %c0_i32 = arith.constant 0 : i32
    %c0_i32_0 = arith.constant 0 : i32
    return %arg0, %c0_i32 : i32, i32
  }
  func.func @transform_1(%arg0: i32) -> (i32, i32) {
    %c0_i32 = arith.constant 0 : i32
    %c0_i32_0 = arith.constant 0 : i32
    %c0_i32_1 = arith.constant 0 : i32
    return %c0_i32, %c0_i32_0 : i32, i32
  }
  func.func @transform_2(%arg0: i32) -> (i32, i32) {
    %c0_i32 = arith.constant 0 : i32
    %c0_i32_0 = arith.constant 0 : i32
    %c0_i32_1 = arith.constant 0 : i32
    return %c0_i32, %c0_i32_0 : i32, i32
  }
  func.func @transform_3(%arg0: i32) -> (i32, i32) {
    %c0_i32 = arith.constant 0 : i32
    %c0_i32_0 = arith.constant 0 : i32
    %c0_i32_1 = arith.constant 0 : i32
    return %c0_i32, %c0_i32_0 : i32, i32
  }
  func.func @transform_4(%arg0: i32) -> (i32, i32) {
    %c0_i32 = arith.constant 0 : i32
    %c0_i32_0 = arith.constant 0 : i32
    %c0_i32_1 = arith.constant 0 : i32
    return %c0_i32, %c0_i32_0 : i32, i32
  }
  func.func @transform_5(%arg0: i32) -> (i32, i32) {
    %c0_i32 = arith.constant 0 : i32
    %c0_i32_0 = arith.constant 0 : i32
    %c0_i32_1 = arith.constant 0 : i32
    return %c0_i32, %c0_i32_0 : i32, i32
  }
  func.func @transform_6(%arg0: i32) -> (i32, i32) {
    %c0_i32 = arith.constant 0 : i32
    %c0_i32_0 = arith.constant 0 : i32
    %c0_i32_1 = arith.constant 0 : i32
    return %c0_i32, %c0_i32_0 : i32, i32
  }
  func.func @transform_7(%arg0: i32) -> (i32, i32) {
    %c0_i32 = arith.constant 0 : i32
    %c0_i32_0 = arith.constant 0 : i32
    return %arg0, %c0_i32 : i32, i32
  }
}

</mosaic_0001>

<llo_original>
// kernel: tpu_custom_call.1
$region0: #{tpu_custom_call.1}
  #allocation0 [shape = 'u32[]', space=smem, size = 0x4, offset = 0x4, fixed_abs, tag = 'smem constant byte address 0x4 - core index']
  #allocation1 [shape = 'u32[72,128]{1,0:T(1,128)}', space=vmem, size = 0x9000, scoped, tag = 'internal scratch']
  %s0 = inlined_call_operand.hbm [shape: bf16[16,768], index: 0, kind: input, shape index: {}]
  %s1 = inlined_call_operand.hbm [shape: bf16[768,512], index: 1, kind: input, shape index: {}]
  %s2 = inlined_call_operand.hbm [shape: f32[1,512], index: 2, kind: input, shape index: {}]
  %s3 = inlined_call_operand.hbm [shape: bf16[512,512], index: 3, kind: input, shape index: {}]
  %s4 = inlined_call_operand.hbm [shape: f32[1,512], index: 4, kind: input, shape index: {}]
  %s5 = inlined_call_operand.hbm [shape: bf16[512,128], index: 5, kind: input, shape index: {}]
  %s6 = inlined_call_operand.vmem [shape: f32[1,128], index: 6, kind: input, shape index: {}]
  %s7 = inlined_call_operand.hbm [shape: bf16[16,128], index: 7, kind: output, shape index: {}]
  %s8 = sld [smem:[#allocation0]]
  $region85: #{tpu_custom_call.1} parent=0
    _
  %s10 = ssub.s32 1, %s8
  %s11 = scalar_select 0, %s10, %s8
  $region1: #{tpu_custom_call.1} parent=0
    #allocation2 [shape = 'u8[24576]{0}', space=vmem, size = 0x6000, scoped, tag = 'input window, operand 0']
    #allocation3 [shape = 's32[2]{0}', space=sflag, size = 0x8, scoped, tag = 'scoped memory for tpu_custom_call.1']
    #allocation4 [shape = 's32[2]{0}', space=sflag, size = 0x8, scoped, tag = 'scoped memory for tpu_custom_call.1']
    #allocation5 [shape = 'u8[786432]{0}', space=vmem, size = 0xc0000, scoped, tag = 'input window, operand 1, single buffered']
    #allocation6 [shape = 's32[1]{0}', space=sflag, size = 0x4, scoped, tag = 'scoped memory for tpu_custom_call.1']
    #allocation7 [shape = 'u8[2048]{0}', space=vmem, size = 0x800, scoped, tag = 'input window, operand 2, single buffered']
    #allocation8 [shape = 'u8[524288]{0}', space=vmem, size = 0x80000, scoped, tag = 'input window, operand 3, single buffered']
    #allocation9 [shape = 's32[1]{0}', space=sflag, size = 0x4, scoped, tag = 'scoped memory for tpu_custom_call.1']
    #allocation10 [shape = 'u8[2048]{0}', space=vmem, size = 0x800, scoped, tag = 'input window, operand 4, single buffered']
    #allocation11 [shape = 'u8[131072]{0}', space=vmem, size = 0x20000, scoped, tag = 'input window, operand 5, single buffered']
    #allocation12 [shape = 's32[1]{0}', space=sflag, size = 0x4, scoped, tag = 'scoped memory for tpu_custom_call.1']
    #allocation13 [shape = 'u8[4096]{0}', space=vmem, size = 0x1000, scoped, tag = 'output window, operand 0']
    %12 = vsyncpa [#allocation3], 0
    %s13 = scalar_lea.sflag [#allocation3], 1
    %14 = vsyncpa %s13, 0
    %15 = vsyncpa [#allocation6], 0
    %16 = vsyncpa [#allocation9], 0
    %17 = vsyncpa [#allocation12], 0
    %18 = vsyncpa [#allocation4], 0
    %s19 = scalar_lea.sflag [#allocation4], 1
    %20 = vsyncpa %s19, 0
    loop: start=0, step=1, limit=4
    $region2: #{tpu_custom_call.1} parent=1 // loop_pre_header
      _
    $region3: #{tpu_custom_call.1} parent=1 // loop_header
      %s22 = sphi 0, %s26
      %p23 = scmp.ge.s32.totalorder %s22, 4
      %s32 = sphi 0, %s34
      %s35 = sphi 0, %s32
      %s36 = sphi 0, %s35
      %s52 = sphi 0, %s36
      %s56 = sphi 0, %s56
      %s58 = sphi 0, %s56
      %s59 = sphi 0, %s58
      %s73 = sphi 0, %s59
      %s77 = sphi 0, %s77
      %s79 = sphi 0, %s77
      %s80 = sphi 0, %s79
      %s94 = sphi 0, %s80
      %s98 = sphi 0, %s98
      %s100 = sphi 0, %s98
      %s101 = sphi 0, %s100
      %s115 = sphi 0, %s101
      %s119 = sphi 0, %s119
      %s121 = sphi 0, %s119
      %s122 = sphi 0, %s121
      %s136 = sphi 0, %s122
      %s140 = sphi 0, %s140
      %s142 = sphi 0, %s140
      %s143 = sphi 0, %s142
      %s157 = sphi 0, %s143
      %s161 = sphi 0, %s161
      %s163 = sphi 0, %s161
      %s164 = sphi 0, %s163
      %s178 = sphi 0, %s164
      %s184 = sphi 0, %s186
      %s187 = sphi 0, %s184
      %s188 = sphi 0, %s187
      %s204 = sphi 0, %s188
    $region4: #{tpu_custom_call.1} parent=1 // loop_header_branch
      %25 = sbr.rel (%p23) target = $region8
    $region5: #{tpu_custom_call.1} parent=1 // loop_body
      %s27 = ssub.s32 %s22, 1
      %s28 = ssub.s32 %s22, 2
      %s29 = sadd.s32 %s22, 1
      %s30 = ssub.s32 %s22, %s29
      %p31 = scmp.eq.s32.totalorder %s30, 0
      %s33 = sadd.s32 %s32, 1
      %s34 = scalar_select %p31, %s32, %s33
      %p37 = pneg %p31
      %p38 = scmp.eq.s32.totalorder %s22, 1
      %p39 = por %p37, %p38
      %p40 = scmp.ne.s32.totalorder %s32, %s35
      %p41 = scmp.eq.s32.totalorder %s22, 0
      %p42 = por %p40, %p41
      %p43 = scmp.ne.s32.totalorder %s32, %s35
      %p44 = scmp.eq.s32.totalorder %s27, 1
      %p45 = por %p43, %p44
      %p46 = scmp.ne.s32.totalorder %s35, %s36
      %p47 = scmp.eq.s32.totalorder %s27, 0
      %p48 = por %p46, %p47
      %p49 = scmp.ne.s32.totalorder %s35, %s36
      %p50 = scmp.eq.s32.totalorder %s28, 1
      %p51 = por %p49, %p50
      %p53 = scmp.ne.s32.totalorder %s36, %s52
      %p54 = scmp.eq.s32.totalorder %s28, 0
      %p55 = por %p53, %p54
      %s57 = sadd.s32 %s56, 1
      %p60 = scmp.eq.s32.totalorder %s22, 1
      %p61 = scmp.ne.s32.totalorder %s56, %s58
      %p62 = scmp.eq.s32.totalorder %s22, 0
      %p63 = por %p61, %p62
      %p64 = scmp.ne.s32.totalorder %s56, %s58
      %p65 = scmp.eq.s32.totalorder %s27, 1
      %p66 = por %p64, %p65
      %p67 = scmp.ne.s32.totalorder %s58, %s59
      %p68 = scmp.eq.s32.totalorder %s27, 0
      %p69 = por %p67, %p68
      %p70 = scmp.ne.s32.totalorder %s58, %s59
      %p71 = scmp.eq.s32.totalorder %s28, 1
      %p72 = por %p70, %p71
      %p74 = scmp.ne.s32.totalorder %s59, %s73
      %p75 = scmp.eq.s32.totalorder %s28, 0
      %p76 = por %p74, %p75
      %s78 = sadd.s32 %s77, 1
      %p81 = scmp.eq.s32.totalorder %s22, 1
      %p82 = scmp.ne.s32.totalorder %s77, %s79
      %p83 = scmp.eq.s32.totalorder %s22, 0
      %p84 = por %p82, %p83
      %p85 = scmp.ne.s32.totalorder %s77, %s79
      %p86 = scmp.eq.s32.totalorder %s27, 1
      %p87 = por %p85, %p86
      %p88 = scmp.ne.s32.totalorder %s79, %s80
      %p89 = scmp.eq.s32.totalorder %s27, 0
      %p90 = por %p88, %p89
      %p91 = scmp.ne.s32.totalorder %s79, %s80
      %p92 = scmp.eq.s32.totalorder %s28, 1
      %p93 = por %p91, %p92
      %p95 = scmp.ne.s32.totalorder %s80, %s94
      %p96 = scmp.eq.s32.totalorder %s28, 0
      %p97 = por %p95, %p96
      %s99 = sadd.s32 %s98, 1
      %p102 = scmp.eq.s32.totalorder %s22, 1
      %p103 = scmp.ne.s32.totalorder %s98, %s100
      %p104 = scmp.eq.s32.totalorder %s22, 0
      %p105 = por %p103, %p104
      %p106 = scmp.ne.s32.totalorder %s98, %s100
      %p107 = scmp.eq.s32.totalorder %s27, 1
      %p108 = por %p106, %p107
      %p109 = scmp.ne.s32.totalorder %s100, %s101
      %p110 = scmp.eq.s32.totalorder %s27, 0
      %p111 = por %p109, %p110
      %p112 = scmp.ne.s32.totalorder %s100, %s101
      %p113 = scmp.eq.s32.totalorder %s28, 1
      %p114 = por %p112, %p113
      %p116 = scmp.ne.s32.totalorder %s101, %s115
      %p117 = scmp.eq.s32.totalorder %s28, 0
      %p118 = por %p116, %p117
      %s120 = sadd.s32 %s119, 1
      %p123 = scmp.eq.s32.totalorder %s22, 1
      %p124 = scmp.ne.s32.totalorder %s119, %s121
      %p125 = scmp.eq.s32.totalorder %s22, 0
      %p126 = por %p124, %p125
      %p127 = scmp.ne.s32.totalorder %s119, %s121
      %p128 = scmp.eq.s32.totalorder %s27, 1
      %p129 = por %p127, %p128
      %p130 = scmp.ne.s32.totalorder %s121, %s122
      %p131 = scmp.eq.s32.totalorder %s27, 0
      %p132 = por %p130, %p131
      %p133 = scmp.ne.s32.totalorder %s121, %s122
      %p134 = scmp.eq.s32.totalorder %s28, 1
      %p135 = por %p133, %p134
      %p137 = scmp.ne.s32.totalorder %s122, %s136
      %p138 = scmp.eq.s32.totalorder %s28, 0
      %p139 = por %p137, %p138
      %s141 = sadd.s32 %s140, 1
      %p144 = scmp.eq.s32.totalorder %s22, 1
      %p145 = scmp.ne.s32.totalorder %s140, %s142
      %p146 = scmp.eq.s32.totalorder %s22, 0
      %p147 = por %p145, %p146
      %p148 = scmp.ne.s32.totalorder %s140, %s142
      %p149 = scmp.eq.s32.totalorder %s27, 1
      %p150 = por %p148, %p149
      %p151 = scmp.ne.s32.totalorder %s142, %s143
      %p152 = scmp.eq.s32.totalorder %s27, 0
      %p153 = por %p151, %p152
      %p154 = scmp.ne.s32.totalorder %s142, %s143
      %p155 = scmp.eq.s32.totalorder %s28, 1
      %p156 = por %p154, %p155
      %p158 = scmp.ne.s32.totalorder %s143, %s157
      %p159 = scmp.eq.s32.totalorder %s28, 0
      %p160 = por %p158, %p159
      %s162 = sadd.s32 %s161, 1
      %p165 = scmp.eq.s32.totalorder %s22, 1
      %p166 = scmp.ne.s32.totalorder %s161, %s163
      %p167 = scmp.eq.s32.totalorder %s22, 0
      %p168 = por %p166, %p167
      %p169 = scmp.ne.s32.totalorder %s161, %s163
      %p170 = scmp.eq.s32.totalorder %s27, 1
      %p171 = por %p169, %p170
      %p172 = scmp.ne.s32.totalorder %s163, %s164
      %p173 = scmp.eq.s32.totalorder %s27, 0
      %p174 = por %p172, %p173
      %p175 = scmp.ne.s32.totalorder %s163, %s164
      %p176 = scmp.eq.s32.totalorder %s28, 1
      %p177 = por %p175, %p176
      %p179 = scmp.ne.s32.totalorder %s164, %s178
      %p180 = scmp.eq.s32.totalorder %s28, 0
      %p181 = por %p179, %p180
      %s182 = ssub.s32 %s22, %s29
      %p183 = scmp.eq.s32.totalorder %s182, 0
      %s185 = sadd.s32 %s184, 1
      %s186 = scalar_select %p183, %s184, %s185
      %p189 = pneg %p183
      %p190 = scmp.eq.s32.totalorder %s22, 1
      %p191 = por %p189, %p190
      %p192 = scmp.ne.s32.totalorder %s184, %s187
      %p193 = scmp.eq.s32.totalorder %s22, 0
      %p194 = por %p192, %p193
      %p195 = scmp.ne.s32.totalorder %s184, %s187
      %p196 = scmp.eq.s32.totalorder %s27, 1
      %p197 = por %p195, %p196
      %p198 = scmp.ne.s32.totalorder %s187, %s188
      %p199 = scmp.eq.s32.totalorder %s27, 0
      %p200 = por %p198, %p199
      %p201 = scmp.ne.s32.totalorder %s187, %s188
      %p202 = scmp.eq.s32.totalorder %s28, 1
      %p203 = por %p201, %p202
      %p205 = scmp.ne.s32.totalorder %s188, %s204
      %p206 = scmp.eq.s32.totalorder %s28, 0
      %p207 = por %p205, %p206
      %p208 = scmp.le.s32.totalorder 1, %s22
      %p209 = scmp.lt.s32.totalorder %s22, 3
      %p210 = pnand %p208, %p209
      %p211 = pneg %p210
      // Predicated region
      $region9: #{tpu_custom_call.1} parent=5 // pred_check
        _
      $region10: #{tpu_custom_call.1} parent=5 // pred_check_branch
        %213 = sbr.rel (%p210) target = $region12
      $region11: #{tpu_custom_call.1} parent=5 // pred_region
        %s214 = ssub.s32 %s22, 1
        // Predicated region
        $region13: #{tpu_custom_call.1} parent=11 // pred_check
          %p215 = pneg %p69
        $region14: #{tpu_custom_call.1} parent=11 // pred_check_branch
          %217 = sbr.rel (%p215) target = $region16
        $region15: #{tpu_custom_call.1} parent=11 // pred_region
          %219 = vsyncadd [#allocation6], 0
          %s220 = sshll.u32 %s1, 4
          %s221 = int_to_ptr.hbm [resolvable:$true] %s220
          %s222 = sshll.u32 [#allocation5], 4
          %s223 = int_to_ptr.vmem [resolvable:$true] %s222
          %228 = dma.hbm_to_vmem [thread:$0]  %s221, 24576, %s223, [#allocation6], 256, 256, 16
        $region16: #{tpu_custom_call.1} parent=11 // pred_fallthru
          _
        // Predicated region
        $region17: #{tpu_custom_call.1} parent=11 // pred_check
          %p229 = pneg %p90
        $region18: #{tpu_custom_call.1} parent=11 // pred_check_branch
          %231 = sbr.rel (%p229) target = $region20
        $region19: #{tpu_custom_call.1} parent=11 // pred_region
          %233 = vsyncadd [#allocation6], 0
          %s235 = sshll.u32 %s2, 4
          %s236 = int_to_ptr.hbm [resolvable:$true] %s235
          %s237 = sshll.u32 [#allocation7], 4
          %s238 = int_to_ptr.vmem [resolvable:$true] %s237
          %240 = dma.hbm_to_vmem [thread:$0]  %s236, 64, %s238, [#allocation6]
        $region20: #{tpu_custom_call.1} parent=11 // pred_fallthru
          _
        // Predicated region
        $region21: #{tpu_custom_call.1} parent=11 // pred_check
          %p241 = pneg %p111
        $region22: #{tpu_custom_call.1} parent=11 // pred_check_branch
          %243 = sbr.rel (%p241) target = $region24
        $region23: #{tpu_custom_call.1} parent=11 // pred_region
          %245 = vsyncadd [#allocation9], 0
          %s246 = sshll.u32 %s3, 4
          %s247 = int_to_ptr.hbm [resolvable:$true] %s246
          %s248 = sshll.u32 [#allocation8], 4
          %s249 = int_to_ptr.vmem [resolvable:$true] %s248
          %254 = dma.hbm_to_vmem [thread:$0]  %s247, 16384, %s249, [#allocation9], 256, 256, 16
        $region24: #{tpu_custom_call.1} parent=11 // pred_fallthru
          _
        // Predicated region
        $region25: #{tpu_custom_call.1} parent=11 // pred_check
          %p255 = pneg %p132
        $region26: #{tpu_custom_call.1} parent=11 // pred_check_branch
          %257 = sbr.rel (%p255) target = $region28
        $region27: #{tpu_custom_call.1} parent=11 // pred_region
          %259 = vsyncadd [#allocation9], 0
          %s261 = sshll.u32 %s4, 4
          %s262 = int_to_ptr.hbm [resolvable:$true] %s261
          %s263 = sshll.u32 [#allocation10], 4
          %s264 = int_to_ptr.vmem [resolvable:$true] %s263
          %266 = dma.hbm_to_vmem [thread:$0]  %s262, 64, %s264, [#allocation9]
        $region28: #{tpu_custom_call.1} parent=11 // pred_fallthru
          _
        // Predicated region
        $region29: #{tpu_custom_call.1} parent=11 // pred_check
          %p267 = pneg %p153
        $region30: #{tpu_custom_call.1} parent=11 // pred_check_branch
          %269 = sbr.rel (%p267) target = $region32
        $region31: #{tpu_custom_call.1} parent=11 // pred_region
          %271 = vsyncadd [#allocation12], 0
          %s272 = sshll.u32 %s5, 4
          %s273 = int_to_ptr.hbm [resolvable:$true] %s272
          %s274 = sshll.u32 [#allocation11], 4
          %s275 = int_to_ptr.vmem [resolvable:$true] %s274
          %280 = dma.hbm_to_vmem [thread:$0]  %s273, 4096, %s275, [#allocation12], 64, 64, 4
        $region32: #{tpu_custom_call.1} parent=11 // pred_fallthru
          _
        // Predicated region
        $region33: #{tpu_custom_call.1} parent=11 // pred_check
          %p281 = pneg %p174
        $region34: #{tpu_custom_call.1} parent=11 // pred_check_branch
          %283 = sbr.rel (%p281) target = $region36
        $region35: #{tpu_custom_call.1} parent=11 // pred_region
          _
        $region36: #{tpu_custom_call.1} parent=11 // pred_fallthru
          _
      $region12: #{tpu_custom_call.1} parent=5 // pred_fallthru
        _
      %p284 = scmp.lt.s32.totalorder %s22, 2
      // Predicated region
      $region37: #{tpu_custom_call.1} parent=5 // pred_check
        %p285 = pneg %p284
      $region38: #{tpu_custom_call.1} parent=5 // pred_check_branch
        %287 = sbr.rel (%p285) target = $region40
      $region39: #{tpu_custom_call.1} parent=5 // pred_region
        // Predicated region
        $region41: #{tpu_custom_call.1} parent=39 // pred_check
          %p288 = pneg %p42
        $region42: #{tpu_custom_call.1} parent=39 // pred_check_branch
          %290 = sbr.rel (%p288) target = $region44
        $region43: #{tpu_custom_call.1} parent=39 // pred_region
          %s291 = sand.u32 %s32, 1
          %s292 = scalar_lea.sflag [#allocation3], %s291
          %s293 = sand.u32 %s32, 1
          %s294 = smul.addr %s293, 24
          %s295 = scalar_lea.vmem [#allocation2], %s294
          %297 = vsyncadd %s292, 0
          %s298 = smul.addr %s22, 6
          %s299 = smul.addr %s298, 4
          %s300 = scalar_lea.hbm %s0, %s299
          %s302 = sshll.u32 %s300, 4
          %s303 = int_to_ptr.hbm [resolvable:$true] %s302
          %s304 = sshll.u32 %s295, 4
          %s305 = int_to_ptr.vmem [resolvable:$true] %s304
          %307 = dma.hbm_to_vmem [thread:$0]  %s303, 384, %s305, %s292
        $region44: #{tpu_custom_call.1} parent=39 // pred_fallthru
          _
      $region40: #{tpu_custom_call.1} parent=5 // pred_fallthru
        _
      %p308 = scmp.le.s32.totalorder 1, %s22
      %p309 = scmp.lt.s32.totalorder %s22, 3
      %p310 = pnand %p308, %p309
      %p311 = pneg %p310
      // Predicated region
      $region45: #{tpu_custom_call.1} parent=5 // pred_check
        _
      $region46: #{tpu_custom_call.1} parent=5 // pred_check_branch
        %313 = sbr.rel (%p310) target = $region48
      $region47: #{tpu_custom_call.1} parent=5 // pred_region
        %s314 = ssub.s32 %s22, 1
        %s315 = sand.u32 %s35, 1
        %s316 = scalar_lea.sflag [#allocation3], %s315
        %s317 = sand.u32 %s35, 1
        %s318 = smul.addr %s317, 24
        %s319 = scalar_lea.vmem [#allocation2], %s318
        // Predicated region
        $region49: #{tpu_custom_call.1} parent=47 // pred_check
          %p320 = pneg %p48
        $region50: #{tpu_custom_call.1} parent=47 // pred_check_branch
          %322 = sbr.rel (%p320) target = $region52
        $region51: #{tpu_custom_call.1} parent=47 // pred_region
          %324 = dma.done %s316, 384
        $region52: #{tpu_custom_call.1} parent=47 // pred_fallthru
          _
        // Predicated region
        $region53: #{tpu_custom_call.1} parent=47 // pred_check
          %p325 = pneg %p69
        $region54: #{tpu_custom_call.1} parent=47 // pred_check_branch
          %327 = sbr.rel (%p325) target = $region56
        $region55: #{tpu_custom_call.1} parent=47 // pred_region
          %329 = dma.done [#allocation6], 24576
        $region56: #{tpu_custom_call.1} parent=47 // pred_fallthru
          _
        // Predicated region
        $region57: #{tpu_custom_call.1} parent=47 // pred_check
          %p330 = pneg %p90
        $region58: #{tpu_custom_call.1} parent=47 // pred_check_branch
          %332 = sbr.rel (%p330) target = $region60
        $region59: #{tpu_custom_call.1} parent=47 // pred_region
          %334 = dma.done [#allocation6], 64
        $region60: #{tpu_custom_call.1} parent=47 // pred_fallthru
          _
        // Predicated region
        $region61: #{tpu_custom_call.1} parent=47 // pred_check
          %p335 = pneg %p111
        $region62: #{tpu_custom_call.1} parent=47 // pred_check_branch
          %337 = sbr.rel (%p335) target = $region64
        $region63: #{tpu_custom_call.1} parent=47 // pred_region
          %339 = dma.done [#allocation9], 16384
        $region64: #{tpu_custom_call.1} parent=47 // pred_fallthru
          _
        // Predicated region
        $region65: #{tpu_custom_call.1} parent=47 // pred_check
          %p340 = pneg %p132
        $region66: #{tpu_custom_call.1} parent=47 // pred_check_branch
          %342 = sbr.rel (%p340) target = $region68
        $region67: #{tpu_custom_call.1} parent=47 // pred_region
          %344 = dma.done [#allocation9], 64
        $region68: #{tpu_custom_call.1} parent=47 // pred_fallthru
          _
        // Predicated region
        $region69: #{tpu_custom_call.1} parent=47 // pred_check
          %p345 = pneg %p153
        $region70: #{tpu_custom_call.1} parent=47 // pred_check_branch
          %347 = sbr.rel (%p345) target = $region72
        $region71: #{tpu_custom_call.1} parent=47 // pred_region
          %349 = dma.done [#allocation12], 4096
        $region72: #{tpu_custom_call.1} parent=47 // pred_fallthru
          _
        %s350 = sand.u32 %s35, 1
        %s351 = scalar_lea.sflag [#allocation3], %s350
        %s352 = sand.u32 %s35, 1
        %s353 = smul.addr %s352, 24
        %s354 = scalar_lea.vmem [#allocation2], %s353
        %p355 = pneg %p48
        %p356 = pneg %p45
        %p357 = pneg %p69
        %p358 = pneg %p66
        %p359 = pneg %p90
        %p360 = pneg %p87
        %p361 = pneg %p111
        %p362 = pneg %p108
        %p363 = pneg %p132
        %p364 = pneg %p129
        %p365 = pneg %p153
        %p366 = pneg %p150
        %p367 = pneg %p174
        %p368 = pneg %p171
        %p369 = pneg %p200
        %p370 = pneg %p197
        %s371 = sand.u32 %s187, 1
        %s372 = scalar_lea.sflag [#allocation4], %s371
        %s373 = sand.u32 %s187, 1
        %s374 = smul.addr %s373, 4
        %s375 = scalar_lea.vmem [#allocation13], %s374
        %v376 = vld [vmem:[%s319] sm:$0xff]
        %v377 = vld [vmem:[%s319 + $0x8] sm:$0xff]
        %v378 = vld [vmem:[%s319 + $0x10] sm:$0xff]
        %v379 = vld [vmem:[#allocation5] sm:$0xff]
        %v380 = vld [vmem:[#allocation5 + $0x8] sm:$0xff]
        %v381 = vld [vmem:[#allocation5 + $0x10] sm:$0xff]
        %v382 = vld [vmem:[#allocation5 + $0x18] sm:$0xff]
        %v383 = vld [vmem:[#allocation5 + $0x20] sm:$0xff]
        %v384 = vld [vmem:[#allocation5 + $0x28] sm:$0xff]
        %v385 = vld [vmem:[#allocation5 + $0x30] sm:$0xff]
        %v386 = vld [vmem:[#allocation5 + $0x38] sm:$0xff]
        %v387 = vld [vmem:[#allocation5 + $0x40] sm:$0xff]
        %v388 = vld [vmem:[#allocation5 + $0x48] sm:$0xff]
        %v389 = vld [vmem:[#allocation5 + $0x50] sm:$0xff]
        %v390 = vld [vmem:[#allocation5 + $0x58] sm:$0xff]
        %v391 = vld [vmem:[#allocation5 + $0x60] sm:$0xff]
        %v392 = vld [vmem:[#allocation5 + $0x68] sm:$0xff]
        %v393 = vld [vmem:[#allocation5 + $0x70] sm:$0xff]
        %v394 = vld [vmem:[#allocation5 + $0x78] sm:$0xff]
        %v395 = vld [vmem:[#allocation5 + $0x80] sm:$0xff]
        %v396 = vld [vmem:[#allocation5 + $0x88] sm:$0xff]
        %v397 = vld [vmem:[#allocation5 + $0x90] sm:$0xff]
        %v398 = vld [vmem:[#allocation5 + $0x98] sm:$0xff]
        %v399 = vld [vmem:[#allocation5 + $0xa0] sm:$0xff]
        %v400 = vld [vmem:[#allocation5 + $0xa8] sm:$0xff]
        %v401 = vld [vmem:[#allocation5 + $0xb0] sm:$0xff]
        %v402 = vld [vmem:[#allocation5 + $0xb8] sm:$0xff]
        %v403 = vld [vmem:[#allocation5 + $0xc0] sm:$0xff]
        %v404 = vld [vmem:[#allocation5 + $0xc8] sm:$0xff]
        %v405 = vld [vmem:[#allocation5 + $0xd0] sm:$0xff]
        %v406 = vld [vmem:[#allocation5 + $0xd8] sm:$0xff]
        %v407 = vld [vmem:[#allocation5 + $0xe0] sm:$0xff]
        %v408 = vld [vmem:[#allocation5 + $0xe8] sm:$0xff]
        %v409 = vld [vmem:[#allocation5 + $0xf0] sm:$0xff]
        %v410 = vld [vmem:[#allocation5 + $0xf8] sm:$0xff]
        %v411 = vld [vmem:[#allocation5 + $0x100] sm:$0xff]
        %v412 = vld [vmem:[#allocation5 + $0x108] sm:$0xff]
        %v413 = vld [vmem:[#allocation5 + $0x110] sm:$0xff]
        %v414 = vld [vmem:[#allocation5 + $0x118] sm:$0xff]
        %v415 = vld [vmem:[#allocation5 + $0x120] sm:$0xff]
        %v416 = vld [vmem:[#allocation5 + $0x128] sm:$0xff]
        %v417 = vld [vmem:[#allocation5 + $0x130] sm:$0xff]
        %v418 = vld [vmem:[#allocation5 + $0x138] sm:$0xff]
        %v419 = vld [vmem:[#allocation5 + $0x140] sm:$0xff]
        %v420 = vld [vmem:[#allocation5 + $0x148] sm:$0xff]
        %v421 = vld [vmem:[#allocation5 + $0x150] sm:$0xff]
        %v422 = vld [vmem:[#allocation5 + $0x158] sm:$0xff]
        %v423 = vld [vmem:[#allocation5 + $0x160] sm:$0xff]
        %v424 = vld [vmem:[#allocation5 + $0x168] sm:$0xff]
        %v425 = vld [vmem:[#allocation5 + $0x170] sm:$0xff]
        %v426 = vld [vmem:[#allocation5 + $0x178] sm:$0xff]
        %v427 = vld [vmem:[#allocation5 + $0x180] sm:$0xff]
        %v428 = vld [vmem:[#allocation5 + $0x188] sm:$0xff]
        %v429 = vld [vmem:[#allocation5 + $0x190] sm:$0xff]
        %v430 = vld [vmem:[#allocation5 + $0x198] sm:$0xff]
        %v431 = vld [vmem:[#allocation5 + $0x1a0] sm:$0xff]
        %v432 = vld [vmem:[#allocation5 + $0x1a8] sm:$0xff]
        %v433 = vld [vmem:[#allocation5 + $0x1b0] sm:$0xff]
        %v434 = vld [vmem:[#allocation5 + $0x1b8] sm:$0xff]
        %v435 = vld [vmem:[#allocation5 + $0x1c0] sm:$0xff]
        %v436 = vld [vmem:[#allocation5 + $0x1c8] sm:$0xff]
        %v437 = vld [vmem:[#allocation5 + $0x1d0] sm:$0xff]
        %v438 = vld [vmem:[#allocation5 + $0x1d8] sm:$0xff]
        %v439 = vld [vmem:[#allocation5 + $0x1e0] sm:$0xff]
        %v440 = vld [vmem:[#allocation5 + $0x1e8] sm:$0xff]
        %v441 = vld [vmem:[#allocation5 + $0x1f0] sm:$0xff]
        %v442 = vld [vmem:[#allocation5 + $0x1f8] sm:$0xff]
        %v443 = vld [vmem:[#allocation5 + $0x200] sm:$0xff]
        %v444 = vld [vmem:[#allocation5 + $0x208] sm:$0xff]
        %v445 = vld [vmem:[#allocation5 + $0x210] sm:$0xff]
        %v446 = vld [vmem:[#allocation5 + $0x218] sm:$0xff]
        %v447 = vld [vmem:[#allocation5 + $0x220] sm:$0xff]
        %v448 = vld [vmem:[#allocation5 + $0x228] sm:$0xff]
        %v449 = vld [vmem:[#allocation5 + $0x230] sm:$0xff]
        %v450 = vld [vmem:[#allocation5 + $0x238] sm:$0xff]
        %v451 = vld [vmem:[#allocation5 + $0x240] sm:$0xff]
        %v452 = vld [vmem:[#allocation5 + $0x248] sm:$0xff]
        %v453 = vld [vmem:[#allocation5 + $0x250] sm:$0xff]
        %v454 = vld [vmem:[#allocation5 + $0x258] sm:$0xff]
        %v455 = vld [vmem:[#allocation5 + $0x260] sm:$0xff]
        %v456 = vld [vmem:[#allocation5 + $0x268] sm:$0xff]
        %v457 = vld [vmem:[#allocation5 + $0x270] sm:$0xff]
        %v458 = vld [vmem:[#allocation5 + $0x278] sm:$0xff]
        %v459 = vld [vmem:[#allocation5 + $0x280] sm:$0xff]
        %v460 = vld [vmem:[#allocation5 + $0x288] sm:$0xff]
        %v461 = vld [vmem:[#allocation5 + $0x290] sm:$0xff]
        %v462 = vld [vmem:[#allocation5 + $0x298] sm:$0xff]
        %v463 = vld [vmem:[#allocation5 + $0x2a0] sm:$0xff]
        %v464 = vld [vmem:[#allocation5 + $0x2a8] sm:$0xff]
        %v465 = vld [vmem:[#allocation5 + $0x2b0] sm:$0xff]
        %v466 = vld [vmem:[#allocation5 + $0x2b8] sm:$0xff]
        %v467 = vld [vmem:[#allocation5 + $0x2c0] sm:$0xff]
        %v468 = vld [vmem:[#allocation5 + $0x2c8] sm:$0xff]
        %v469 = vld [vmem:[#allocation5 + $0x2d0] sm:$0xff]
        %v470 = vld [vmem:[#allocation5 + $0x2d8] sm:$0xff]
        %v471 = vld [vmem:[#allocation5 + $0x2e0] sm:$0xff]
        %v472 = vld [vmem:[#allocation5 + $0x2e8] sm:$0xff]
        %v473 = vld [vmem:[#allocation5 + $0x2f0] sm:$0xff]
        %v474 = vld [vmem:[#allocation5 + $0x2f8] sm:$0xff]
        %v475 = vld [vmem:[#allocation5 + $0x300] sm:$0xff]
        %v476 = vld [vmem:[#allocation5 + $0x308] sm:$0xff]
        %v477 = vld [vmem:[#allocation5 + $0x310] sm:$0xff]
        %v478 = vld [vmem:[#allocation5 + $0x318] sm:$0xff]
        %v479 = vld [vmem:[#allocation5 + $0x320] sm:$0xff]
        %v480 = vld [vmem:[#allocation5 + $0x328] sm:$0xff]
        %v481 = vld [vmem:[#allocation5 + $0x330] sm:$0xff]
        %v482 = vld [vmem:[#allocation5 + $0x338] sm:$0xff]
        %v483 = vld [vmem:[#allocation5 + $0x340] sm:$0xff]
        %v484 = vld [vmem:[#allocation5 + $0x348] sm:$0xff]
        %v485 = vld [vmem:[#allocation5 + $0x350] sm:$0xff]
        %v486 = vld [vmem:[#allocation5 + $0x358] sm:$0xff]
        %v487 = vld [vmem:[#allocation5 + $0x360] sm:$0xff]
        %v488 = vld [vmem:[#allocation5 + $0x368] sm:$0xff]
        %v489 = vld [vmem:[#allocation5 + $0x370] sm:$0xff]
        %v490 = vld [vmem:[#allocation5 + $0x378] sm:$0xff]
        %v491 = vld [vmem:[#allocation5 + $0x380] sm:$0xff]
        %v492 = vld [vmem:[#allocation5 + $0x388] sm:$0xff]
        %v493 = vld [vmem:[#allocation5 + $0x390] sm:$0xff]
        %v494 = vld [vmem:[#allocation5 + $0x398] sm:$0xff]
        %v495 = vld [vmem:[#allocation5 + $0x3a0] sm:$0xff]
        %v496 = vld [vmem:[#allocation5 + $0x3a8] sm:$0xff]
        %v497 = vld [vmem:[#allocation5 + $0x3b0] sm:$0xff]
        %v498 = vld [vmem:[#allocation5 + $0x3b8] sm:$0xff]
        %v499 = vld [vmem:[#allocation5 + $0x3c0] sm:$0xff]
        %v500 = vld [vmem:[#allocation5 + $0x3c8] sm:$0xff]
        %v501 = vld [vmem:[#allocation5 + $0x3d0] sm:$0xff]
        %v502 = vld [vmem:[#allocation5 + $0x3d8] sm:$0xff]
        %v503 = vld [vmem:[#allocation5 + $0x3e0] sm:$0xff]
        %v504 = vld [vmem:[#allocation5 + $0x3e8] sm:$0xff]
        %v505 = vld [vmem:[#allocation5 + $0x3f0] sm:$0xff]
        %v506 = vld [vmem:[#allocation5 + $0x3f8] sm:$0xff]
        %v507 = vld [vmem:[#allocation5 + $0x400] sm:$0xff]
        %v508 = vld [vmem:[#allocation5 + $0x408] sm:$0xff]
        %v509 = vld [vmem:[#allocation5 + $0x410] sm:$0xff]
        %v510 = vld [vmem:[#allocation5 + $0x418] sm:$0xff]
        %v511 = vld [vmem:[#allocation5 + $0x420] sm:$0xff]
        %v512 = vld [vmem:[#allocation5 + $0x428] sm:$0xff]
        %v513 = vld [vmem:[#allocation5 + $0x430] sm:$0xff]
        %v514 = vld [vmem:[#allocation5 + $0x438] sm:$0xff]
        %v515 = vld [vmem:[#allocation5 + $0x440] sm:$0xff]
        %v516 = vld [vmem:[#allocation5 + $0x448] sm:$0xff]
        %v517 = vld [vmem:[#allocation5 + $0x450] sm:$0xff]
        %v518 = vld [vmem:[#allocation5 + $0x458] sm:$0xff]
        %v519 = vld [vmem:[#allocation5 + $0x460] sm:$0xff]
        %v520 = vld [vmem:[#allocation5 + $0x468] sm:$0xff]
        %v521 = vld [vmem:[#allocation5 + $0x470] sm:$0xff]
        %v522 = vld [vmem:[#allocation5 + $0x478] sm:$0xff]
        %v523 = vld [vmem:[#allocation5 + $0x480] sm:$0xff]
        %v524 = vld [vmem:[#allocation5 + $0x488] sm:$0xff]
        %v525 = vld [vmem:[#allocation5 + $0x490] sm:$0xff]
        %v526 = vld [vmem:[#allocation5 + $0x498] sm:$0xff]
        %v527 = vld [vmem:[#allocation5 + $0x4a0] sm:$0xff]
        %v528 = vld [vmem:[#allocation5 + $0x4a8] sm:$0xff]
        %v529 = vld [vmem:[#allocation5 + $0x4b0] sm:$0xff]
        %v530 = vld [vmem:[#allocation5 + $0x4b8] sm:$0xff]
        %v531 = vld [vmem:[#allocation5 + $0x4c0] sm:$0xff]
        %v532 = vld [vmem:[#allocation5 + $0x4c8] sm:$0xff]
        %v533 = vld [vmem:[#allocation5 + $0x4d0] sm:$0xff]
        %v534 = vld [vmem:[#allocation5 + $0x4d8] sm:$0xff]
        %v535 = vld [vmem:[#allocation5 + $0x4e0] sm:$0xff]
        %v536 = vld [vmem:[#allocation5 + $0x4e8] sm:$0xff]
        %v537 = vld [vmem:[#allocation5 + $0x4f0] sm:$0xff]
        %v538 = vld [vmem:[#allocation5 + $0x4f8] sm:$0xff]
        %v539 = vld [vmem:[#allocation5 + $0x500] sm:$0xff]
        %v540 = vld [vmem:[#allocation5 + $0x508] sm:$0xff]
        %v541 = vld [vmem:[#allocation5 + $0x510] sm:$0xff]
        %v542 = vld [vmem:[#allocation5 + $0x518] sm:$0xff]
        %v543 = vld [vmem:[#allocation5 + $0x520] sm:$0xff]
        %v544 = vld [vmem:[#allocation5 + $0x528] sm:$0xff]
        %v545 = vld [vmem:[#allocation5 + $0x530] sm:$0xff]
        %v546 = vld [vmem:[#allocation5 + $0x538] sm:$0xff]
        %v547 = vld [vmem:[#allocation5 + $0x540] sm:$0xff]
        %v548 = vld [vmem:[#allocation5 + $0x548] sm:$0xff]
        %v549 = vld [vmem:[#allocation5 + $0x550] sm:$0xff]
        %v550 = vld [vmem:[#allocation5 + $0x558] sm:$0xff]
        %v551 = vld [vmem:[#allocation5 + $0x560] sm:$0xff]
        %v552 = vld [vmem:[#allocation5 + $0x568] sm:$0xff]
        %v553 = vld [vmem:[#allocation5 + $0x570] sm:$0xff]
        %v554 = vld [vmem:[#allocation5 + $0x578] sm:$0xff]
        %v555 = vld [vmem:[#allocation5 + $0x580] sm:$0xff]
        %v556 = vld [vmem:[#allocation5 + $0x588] sm:$0xff]
        %v557 = vld [vmem:[#allocation5 + $0x590] sm:$0xff]
        %v558 = vld [vmem:[#allocation5 + $0x598] sm:$0xff]
        %v559 = vld [vmem:[#allocation5 + $0x5a0] sm:$0xff]
        %v560 = vld [vmem:[#allocation5 + $0x5a8] sm:$0xff]
        %v561 = vld [vmem:[#allocation5 + $0x5b0] sm:$0xff]
        %v562 = vld [vmem:[#allocation5 + $0x5b8] sm:$0xff]
        %v563 = vld [vmem:[#allocation5 + $0x5c0] sm:$0xff]
        %v564 = vld [vmem:[#allocation5 + $0x5c8] sm:$0xff]
        %v565 = vld [vmem:[#allocation5 + $0x5d0] sm:$0xff]
        %v566 = vld [vmem:[#allocation5 + $0x5d8] sm:$0xff]
        %v567 = vld [vmem:[#allocation5 + $0x5e0] sm:$0xff]
        %v568 = vld [vmem:[#allocation5 + $0x5e8] sm:$0xff]
        %v569 = vld [vmem:[#allocation5 + $0x5f0] sm:$0xff]
        %v570 = vld [vmem:[#allocation5 + $0x5f8] sm:$0xff]
        %v571 = vld [vmem:[#allocation7] sm:$0xf]
        %v573 = vperm.slane %v571, 0
        %v574 = vperm.slane %v571, 1
        %v575 = vperm.slane %v571, 2
        %v576 = vperm.slane %v571, 3
        %v584 = vunpack.c.l.b16 %v376
        %v585 = vunpack.c.h.b16 %v376
        %v586 = vunpack.c.l.b16 %v377
        %v587 = vunpack.c.h.b16 %v377
        %v588 = vunpack.c.l.b16 %v378
        %v589 = vunpack.c.h.b16 %v378
        %v590 = vpack.c.b16 %v584, %v584
        %v591 = vpack.c.b16 %v585, %v585
        %v592 = vpack.c.b16 %v586, %v586
        %v593 = vpack.c.b16 %v587, %v587
        %v594 = vpack.c.b16 %v588, %v588
        %v595 = vpack.c.b16 %v589, %v589
        %v794 = vunpack.c.l.b16 %v379
        %v795 = vunpack.c.h.b16 %v379
        %v796 = vunpack.c.l.b16 %v380
        %v797 = vunpack.c.h.b16 %v380
        %v798 = vunpack.c.l.b16 %v381
        %v799 = vunpack.c.h.b16 %v381
        %v800 = vunpack.c.l.b16 %v382
        %v801 = vunpack.c.h.b16 %v382
        %v802 = vunpack.c.l.b16 %v383
        %v803 = vunpack.c.h.b16 %v383
        %v804 = vunpack.c.l.b16 %v384
        %v805 = vunpack.c.h.b16 %v384
        %v806 = vunpack.c.l.b16 %v385
        %v807 = vunpack.c.h.b16 %v385
        %v808 = vunpack.c.l.b16 %v386
        %v809 = vunpack.c.h.b16 %v386
        %v810 = vunpack.c.l.b16 %v387
        %v811 = vunpack.c.h.b16 %v387
        %v812 = vunpack.c.l.b16 %v388
        %v813 = vunpack.c.h.b16 %v388
        %v814 = vunpack.c.l.b16 %v389
        %v815 = vunpack.c.h.b16 %v389
        %v816 = vunpack.c.l.b16 %v390
        %v817 = vunpack.c.h.b16 %v390
        %v818 = vunpack.c.l.b16 %v391
        %v819 = vunpack.c.h.b16 %v391
        %v820 = vunpack.c.l.b16 %v392
        %v821 = vunpack.c.h.b16 %v392
        %v822 = vunpack.c.l.b16 %v393
        %v823 = vunpack.c.h.b16 %v393
        %v824 = vunpack.c.l.b16 %v394
        %v825 = vunpack.c.h.b16 %v394
        %v826 = vunpack.c.l.b16 %v395
        %v827 = vunpack.c.h.b16 %v395
        %v828 = vunpack.c.l.b16 %v396
        %v829 = vunpack.c.h.b16 %v396
        %v830 = vunpack.c.l.b16 %v397
        %v831 = vunpack.c.h.b16 %v397
        %v832 = vunpack.c.l.b16 %v398
        %v833 = vunpack.c.h.b16 %v398
        %v834 = vunpack.c.l.b16 %v399
        %v835 = vunpack.c.h.b16 %v399
        %v836 = vunpack.c.l.b16 %v400
        %v837 = vunpack.c.h.b16 %v400
        %v838 = vunpack.c.l.b16 %v401
        %v839 = vunpack.c.h.b16 %v401
        %v840 = vunpack.c.l.b16 %v402
        %v841 = vunpack.c.h.b16 %v402
        %v842 = vunpack.c.l.b16 %v403
        %v843 = vunpack.c.h.b16 %v403
        %v844 = vunpack.c.l.b16 %v404
        %v845 = vunpack.c.h.b16 %v404
        %v846 = vunpack.c.l.b16 %v405
        %v847 = vunpack.c.h.b16 %v405
        %v848 = vunpack.c.l.b16 %v406
        %v849 = vunpack.c.h.b16 %v406
        %v850 = vunpack.c.l.b16 %v407
        %v851 = vunpack.c.h.b16 %v407
        %v852 = vunpack.c.l.b16 %v408
        %v853 = vunpack.c.h.b16 %v408
        %v854 = vunpack.c.l.b16 %v409
        %v855 = vunpack.c.h.b16 %v409
        %v856 = vunpack.c.l.b16 %v410
        %v857 = vunpack.c.h.b16 %v410
        %v858 = vunpack.c.l.b16 %v411
        %v859 = vunpack.c.h.b16 %v411
        %v860 = vunpack.c.l.b16 %v412
        %v861 = vunpack.c.h.b16 %v412
        %v862 = vunpack.c.l.b16 %v413
        %v863 = vunpack.c.h.b16 %v413
        %v864 = vunpack.c.l.b16 %v414
        %v865 = vunpack.c.h.b16 %v414
        %v866 = vunpack.c.l.b16 %v415
        %v867 = vunpack.c.h.b16 %v415
        %v868 = vunpack.c.l.b16 %v416
        %v869 = vunpack.c.h.b16 %v416
        %v870 = vunpack.c.l.b16 %v417
        %v871 = vunpack.c.h.b16 %v417
        %v872 = vunpack.c.l.b16 %v418
        %v873 = vunpack.c.h.b16 %v418
        %v874 = vunpack.c.l.b16 %v419
        %v875 = vunpack.c.h.b16 %v419
        %v876 = vunpack.c.l.b16 %v420
        %v877 = vunpack.c.h.b16 %v420
        %v878 = vunpack.c.l.b16 %v421
        %v879 = vunpack.c.h.b16 %v421
        %v880 = vunpack.c.l.b16 %v422
        %v881 = vunpack.c.h.b16 %v422
        %v882 = vunpack.c.l.b16 %v423
        %v883 = vunpack.c.h.b16 %v423
        %v884 = vunpack.c.l.b16 %v424
        %v885 = vunpack.c.h.b16 %v424
        %v886 = vunpack.c.l.b16 %v425
        %v887 = vunpack.c.h.b16 %v425
        %v888 = vunpack.c.l.b16 %v426
        %v889 = vunpack.c.h.b16 %v426
        %v890 = vunpack.c.l.b16 %v427
        %v891 = vunpack.c.h.b16 %v427
        %v892 = vunpack.c.l.b16 %v428
        %v893 = vunpack.c.h.b16 %v428
        %v894 = vunpack.c.l.b16 %v429
        %v895 = vunpack.c.h.b16 %v429
        %v896 = vunpack.c.l.b16 %v430
        %v897 = vunpack.c.h.b16 %v430
        %v898 = vunpack.c.l.b16 %v431
        %v899 = vunpack.c.h.b16 %v431
        %v900 = vunpack.c.l.b16 %v432
        %v901 = vunpack.c.h.b16 %v432
        %v902 = vunpack.c.l.b16 %v433
        %v903 = vunpack.c.h.b16 %v433
        %v904 = vunpack.c.l.b16 %v434
        %v905 = vunpack.c.h.b16 %v434
        %v906 = vunpack.c.l.b16 %v435
        %v907 = vunpack.c.h.b16 %v435
        %v908 = vunpack.c.l.b16 %v436
        %v909 = vunpack.c.h.b16 %v436
        %v910 = vunpack.c.l.b16 %v437
        %v911 = vunpack.c.h.b16 %v437
        %v912 = vunpack.c.l.b16 %v438
        %v913 = vunpack.c.h.b16 %v438
        %v914 = vunpack.c.l.b16 %v439
        %v915 = vunpack.c.h.b16 %v439
        %v916 = vunpack.c.l.b16 %v440
        %v917 = vunpack.c.h.b16 %v440
        %v918 = vunpack.c.l.b16 %v441
        %v919 = vunpack.c.h.b16 %v441
        %v920 = vunpack.c.l.b16 %v442
        %v921 = vunpack.c.h.b16 %v442
        %v922 = vunpack.c.l.b16 %v443
        %v923 = vunpack.c.h.b16 %v443
        %v924 = vunpack.c.l.b16 %v444
        %v925 = vunpack.c.h.b16 %v444
        %v926 = vunpack.c.l.b16 %v445
        %v927 = vunpack.c.h.b16 %v445
        %v928 = vunpack.c.l.b16 %v446
        %v929 = vunpack.c.h.b16 %v446
        %v930 = vunpack.c.l.b16 %v447
        %v931 = vunpack.c.h.b16 %v447
        %v932 = vunpack.c.l.b16 %v448
        %v933 = vunpack.c.h.b16 %v448
        %v934 = vunpack.c.l.b16 %v449
        %v935 = vunpack.c.h.b16 %v449
        %v936 = vunpack.c.l.b16 %v450
        %v937 = vunpack.c.h.b16 %v450
        %v938 = vunpack.c.l.b16 %v451
        %v939 = vunpack.c.h.b16 %v451
        %v940 = vunpack.c.l.b16 %v452
        %v941 = vunpack.c.h.b16 %v452
        %v942 = vunpack.c.l.b16 %v453
        %v943 = vunpack.c.h.b16 %v453
        %v944 = vunpack.c.l.b16 %v454
        %v945 = vunpack.c.h.b16 %v454
        %v946 = vunpack.c.l.b16 %v455
        %v947 = vunpack.c.h.b16 %v455
        %v948 = vunpack.c.l.b16 %v456
        %v949 = vunpack.c.h.b16 %v456
        %v950 = vunpack.c.l.b16 %v457
        %v951 = vunpack.c.h.b16 %v457
        %v952 = vunpack.c.l.b16 %v458
        %v953 = vunpack.c.h.b16 %v458
        %v954 = vunpack.c.l.b16 %v459
        %v955 = vunpack.c.h.b16 %v459
        %v956 = vunpack.c.l.b16 %v460
        %v957 = vunpack.c.h.b16 %v460
        %v958 = vunpack.c.l.b16 %v461
        %v959 = vunpack.c.h.b16 %v461
        %v960 = vunpack.c.l.b16 %v462
        %v961 = vunpack.c.h.b16 %v462
        %v962 = vunpack.c.l.b16 %v463
        %v963 = vunpack.c.h.b16 %v463
        %v964 = vunpack.c.l.b16 %v464
        %v965 = vunpack.c.h.b16 %v464
        %v966 = vunpack.c.l.b16 %v465
        %v967 = vunpack.c.h.b16 %v465
        %v968 = vunpack.c.l.b16 %v466
        %v969 = vunpack.c.h.b16 %v466
        %v970 = vunpack.c.l.b16 %v467
        %v971 = vunpack.c.h.b16 %v467
        %v972 = vunpack.c.l.b16 %v468
        %v973 = vunpack.c.h.b16 %v468
        %v974 = vunpack.c.l.b16 %v469
        %v975 = vunpack.c.h.b16 %v469
        %v976 = vunpack.c.l.b16 %v470
        %v977 = vunpack.c.h.b16 %v470
        %v978 = vunpack.c.l.b16 %v471
        %v979 = vunpack.c.h.b16 %v471
        %v980 = vunpack.c.l.b16 %v472
        %v981 = vunpack.c.h.b16 %v472
        %v982 = vunpack.c.l.b16 %v473
        %v983 = vunpack.c.h.b16 %v473
        %v984 = vunpack.c.l.b16 %v474
        %v985 = vunpack.c.h.b16 %v474
        %v986 = vunpack.c.l.b16 %v475
        %v987 = vunpack.c.h.b16 %v475
        %v988 = vunpack.c.l.b16 %v476
        %v989 = vunpack.c.h.b16 %v476
        %v990 = vunpack.c.l.b16 %v477
        %v991 = vunpack.c.h.b16 %v477
        %v992 = vunpack.c.l.b16 %v478
        %v993 = vunpack.c.h.b16 %v478
        %v994 = vunpack.c.l.b16 %v479
        %v995 = vunpack.c.h.b16 %v479
        %v996 = vunpack.c.l.b16 %v480
        %v997 = vunpack.c.h.b16 %v480
        %v998 = vunpack.c.l.b16 %v481
        %v999 = vunpack.c.h.b16 %v481
        %v1000 = vunpack.c.l.b16 %v482
        %v1001 = vunpack.c.h.b16 %v482
        %v1002 = vunpack.c.l.b16 %v483
        %v1003 = vunpack.c.h.b16 %v483
        %v1004 = vunpack.c.l.b16 %v484
        %v1005 = vunpack.c.h.b16 %v484
        %v1006 = vunpack.c.l.b16 %v485
        %v1007 = vunpack.c.h.b16 %v485
        %v1008 = vunpack.c.l.b16 %v486
        %v1009 = vunpack.c.h.b16 %v486
        %v1010 = vunpack.c.l.b16 %v487
        %v1011 = vunpack.c.h.b16 %v487
        %v1012 = vunpack.c.l.b16 %v488
        %v1013 = vunpack.c.h.b16 %v488
        %v1014 = vunpack.c.l.b16 %v489
        %v1015 = vunpack.c.h.b16 %v489
        %v1016 = vunpack.c.l.b16 %v490
        %v1017 = vunpack.c.h.b16 %v490
        %v1018 = vunpack.c.l.b16 %v491
        %v1019 = vunpack.c.h.b16 %v491
        %v1020 = vunpack.c.l.b16 %v492
        %v1021 = vunpack.c.h.b16 %v492
        %v1022 = vunpack.c.l.b16 %v493
        %v1023 = vunpack.c.h.b16 %v493
        %v1024 = vunpack.c.l.b16 %v494
        %v1025 = vunpack.c.h.b16 %v494
        %v1026 = vunpack.c.l.b16 %v495
        %v1027 = vunpack.c.h.b16 %v495
        %v1028 = vunpack.c.l.b16 %v496
        %v1029 = vunpack.c.h.b16 %v496
        %v1030 = vunpack.c.l.b16 %v497
        %v1031 = vunpack.c.h.b16 %v497
        %v1032 = vunpack.c.l.b16 %v498
        %v1033 = vunpack.c.h.b16 %v498
        %v1034 = vunpack.c.l.b16 %v499
        %v1035 = vunpack.c.h.b16 %v499
        %v1036 = vunpack.c.l.b16 %v500
        %v1037 = vunpack.c.h.b16 %v500
        %v1038 = vunpack.c.l.b16 %v501
        %v1039 = vunpack.c.h.b16 %v501
        %v1040 = vunpack.c.l.b16 %v502
        %v1041 = vunpack.c.h.b16 %v502
        %v1042 = vunpack.c.l.b16 %v503
        %v1043 = vunpack.c.h.b16 %v503
        %v1044 = vunpack.c.l.b16 %v504
        %v1045 = vunpack.c.h.b16 %v504
        %v1046 = vunpack.c.l.b16 %v505
        %v1047 = vunpack.c.h.b16 %v505
        %v1048 = vunpack.c.l.b16 %v506
        %v1049 = vunpack.c.h.b16 %v506
        %v1050 = vunpack.c.l.b16 %v507
        %v1051 = vunpack.c.h.b16 %v507
        %v1052 = vunpack.c.l.b16 %v508
        %v1053 = vunpack.c.h.b16 %v508
        %v1054 = vunpack.c.l.b16 %v509
        %v1055 = vunpack.c.h.b16 %v509
        %v1056 = vunpack.c.l.b16 %v510
        %v1057 = vunpack.c.h.b16 %v510
        %v1058 = vunpack.c.l.b16 %v511
        %v1059 = vunpack.c.h.b16 %v511
        %v1060 = vunpack.c.l.b16 %v512
        %v1061 = vunpack.c.h.b16 %v512
        %v1062 = vunpack.c.l.b16 %v513
        %v1063 = vunpack.c.h.b16 %v513
        %v1064 = vunpack.c.l.b16 %v514
        %v1065 = vunpack.c.h.b16 %v514
        %v1066 = vunpack.c.l.b16 %v515
        %v1067 = vunpack.c.h.b16 %v515
        %v1068 = vunpack.c.l.b16 %v516
        %v1069 = vunpack.c.h.b16 %v516
        %v1070 = vunpack.c.l.b16 %v517
        %v1071 = vunpack.c.h.b16 %v517
        %v1072 = vunpack.c.l.b16 %v518
        %v1073 = vunpack.c.h.b16 %v518
        %v1074 = vunpack.c.l.b16 %v519
        %v1075 = vunpack.c.h.b16 %v519
        %v1076 = vunpack.c.l.b16 %v520
        %v1077 = vunpack.c.h.b16 %v520
        %v1078 = vunpack.c.l.b16 %v521
        %v1079 = vunpack.c.h.b16 %v521
        %v1080 = vunpack.c.l.b16 %v522
        %v1081 = vunpack.c.h.b16 %v522
        %v1082 = vunpack.c.l.b16 %v523
        %v1083 = vunpack.c.h.b16 %v523
        %v1084 = vunpack.c.l.b16 %v524
        %v1085 = vunpack.c.h.b16 %v524
        %v1086 = vunpack.c.l.b16 %v525
        %v1087 = vunpack.c.h.b16 %v525
        %v1088 = vunpack.c.l.b16 %v526
        %v1089 = vunpack.c.h.b16 %v526
        %v1090 = vunpack.c.l.b16 %v527
        %v1091 = vunpack.c.h.b16 %v527
        %v1092 = vunpack.c.l.b16 %v528
        %v1093 = vunpack.c.h.b16 %v528
        %v1094 = vunpack.c.l.b16 %v529
        %v1095 = vunpack.c.h.b16 %v529
        %v1096 = vunpack.c.l.b16 %v530
        %v1097 = vunpack.c.h.b16 %v530
        %v1098 = vunpack.c.l.b16 %v531
        %v1099 = vunpack.c.h.b16 %v531
        %v1100 = vunpack.c.l.b16 %v532
        %v1101 = vunpack.c.h.b16 %v532
        %v1102 = vunpack.c.l.b16 %v533
        %v1103 = vunpack.c.h.b16 %v533
        %v1104 = vunpack.c.l.b16 %v534
        %v1105 = vunpack.c.h.b16 %v534
        %v1106 = vunpack.c.l.b16 %v535
        %v1107 = vunpack.c.h.b16 %v535
        %v1108 = vunpack.c.l.b16 %v536
        %v1109 = vunpack.c.h.b16 %v536
        %v1110 = vunpack.c.l.b16 %v537
        %v1111 = vunpack.c.h.b16 %v537
        %v1112 = vunpack.c.l.b16 %v538
        %v1113 = vunpack.c.h.b16 %v538
        %v1114 = vunpack.c.l.b16 %v539
        %v1115 = vunpack.c.h.b16 %v539
        %v1116 = vunpack.c.l.b16 %v540
        %v1117 = vunpack.c.h.b16 %v540
        %v1118 = vunpack.c.l.b16 %v541
        %v1119 = vunpack.c.h.b16 %v541
        %v1120 = vunpack.c.l.b16 %v542
        %v1121 = vunpack.c.h.b16 %v542
        %v1122 = vunpack.c.l.b16 %v543
        %v1123 = vunpack.c.h.b16 %v543
        %v1124 = vunpack.c.l.b16 %v544
        %v1125 = vunpack.c.h.b16 %v544
        %v1126 = vunpack.c.l.b16 %v545
        %v1127 = vunpack.c.h.b16 %v545
        %v1128 = vunpack.c.l.b16 %v546
        %v1129 = vunpack.c.h.b16 %v546
        %v1130 = vunpack.c.l.b16 %v547
        %v1131 = vunpack.c.h.b16 %v547
        %v1132 = vunpack.c.l.b16 %v548
        %v1133 = vunpack.c.h.b16 %v548
        %v1134 = vunpack.c.l.b16 %v549
        %v1135 = vunpack.c.h.b16 %v549
        %v1136 = vunpack.c.l.b16 %v550
        %v1137 = vunpack.c.h.b16 %v550
        %v1138 = vunpack.c.l.b16 %v551
        %v1139 = vunpack.c.h.b16 %v551
        %v1140 = vunpack.c.l.b16 %v552
        %v1141 = vunpack.c.h.b16 %v552
        %v1142 = vunpack.c.l.b16 %v553
        %v1143 = vunpack.c.h.b16 %v553
        %v1144 = vunpack.c.l.b16 %v554
        %v1145 = vunpack.c.h.b16 %v554
        %v1146 = vunpack.c.l.b16 %v555
        %v1147 = vunpack.c.h.b16 %v555
        %v1148 = vunpack.c.l.b16 %v556
        %v1149 = vunpack.c.h.b16 %v556
        %v1150 = vunpack.c.l.b16 %v557
        %v1151 = vunpack.c.h.b16 %v557
        %v1152 = vunpack.c.l.b16 %v558
        %v1153 = vunpack.c.h.b16 %v558
        %v1154 = vunpack.c.l.b16 %v559
        %v1155 = vunpack.c.h.b16 %v559
        %v1156 = vunpack.c.l.b16 %v560
        %v1157 = vunpack.c.h.b16 %v560
        %v1158 = vunpack.c.l.b16 %v561
        %v1159 = vunpack.c.h.b16 %v561
        %v1160 = vunpack.c.l.b16 %v562
        %v1161 = vunpack.c.h.b16 %v562
        %v1162 = vunpack.c.l.b16 %v563
        %v1163 = vunpack.c.h.b16 %v563
        %v1164 = vunpack.c.l.b16 %v564
        %v1165 = vunpack.c.h.b16 %v564
        %v1166 = vunpack.c.l.b16 %v565
        %v1167 = vunpack.c.h.b16 %v565
        %v1168 = vunpack.c.l.b16 %v566
        %v1169 = vunpack.c.h.b16 %v566
        %v1170 = vunpack.c.l.b16 %v567
        %v1171 = vunpack.c.h.b16 %v567
        %v1172 = vunpack.c.l.b16 %v568
        %v1173 = vunpack.c.h.b16 %v568
        %v1174 = vunpack.c.l.b16 %v569
        %v1175 = vunpack.c.h.b16 %v569
        %v1176 = vunpack.c.l.b16 %v570
        %v1177 = vunpack.c.h.b16 %v570
        %v1178 = vpack.c.b16 %v798, %v794
        %v1179 = vpack.c.b16 %v799, %v795
        %v1180 = vpack.c.b16 %v800, %v796
        %v1181 = vpack.c.b16 %v801, %v797
        %v1182 = vpack.c.b16 %v806, %v802
        %v1183 = vpack.c.b16 %v807, %v803
        %v1184 = vpack.c.b16 %v808, %v804
        %v1185 = vpack.c.b16 %v809, %v805
        %v1186 = vpack.c.b16 %v814, %v810
        %v1187 = vpack.c.b16 %v815, %v811
        %v1188 = vpack.c.b16 %v816, %v812
        %v1189 = vpack.c.b16 %v817, %v813
        %v1190 = vpack.c.b16 %v822, %v818
        %v1191 = vpack.c.b16 %v823, %v819
        %v1192 = vpack.c.b16 %v824, %v820
        %v1193 = vpack.c.b16 %v825, %v821
        %v1194 = vpack.c.b16 %v830, %v826
        %v1195 = vpack.c.b16 %v831, %v827
        %v1196 = vpack.c.b16 %v832, %v828
        %v1197 = vpack.c.b16 %v833, %v829
        %v1198 = vpack.c.b16 %v838, %v834
        %v1199 = vpack.c.b16 %v839, %v835
        %v1200 = vpack.c.b16 %v840, %v836
        %v1201 = vpack.c.b16 %v841, %v837
        %v1202 = vpack.c.b16 %v846, %v842
        %v1203 = vpack.c.b16 %v847, %v843
        %v1204 = vpack.c.b16 %v848, %v844
        %v1205 = vpack.c.b16 %v849, %v845
        %v1206 = vpack.c.b16 %v854, %v850
        %v1207 = vpack.c.b16 %v855, %v851
        %v1208 = vpack.c.b16 %v856, %v852
        %v1209 = vpack.c.b16 %v857, %v853
        %v1210 = vpack.c.b16 %v862, %v858
        %v1211 = vpack.c.b16 %v863, %v859
        %v1212 = vpack.c.b16 %v864, %v860
        %v1213 = vpack.c.b16 %v865, %v861
        %v1214 = vpack.c.b16 %v870, %v866
        %v1215 = vpack.c.b16 %v871, %v867
        %v1216 = vpack.c.b16 %v872, %v868
        %v1217 = vpack.c.b16 %v873, %v869
        %v1218 = vpack.c.b16 %v878, %v874
        %v1219 = vpack.c.b16 %v879, %v875
        %v1220 = vpack.c.b16 %v880, %v876
        %v1221 = vpack.c.b16 %v881, %v877
        %v1222 = vpack.c.b16 %v886, %v882
        %v1223 = vpack.c.b16 %v887, %v883
        %v1224 = vpack.c.b16 %v888, %v884
        %v1225 = vpack.c.b16 %v889, %v885
        %v1226 = vpack.c.b16 %v894, %v890
        %v1227 = vpack.c.b16 %v895, %v891
        %v1228 = vpack.c.b16 %v896, %v892
        %v1229 = vpack.c.b16 %v897, %v893
        %v1230 = vpack.c.b16 %v902, %v898
        %v1231 = vpack.c.b16 %v903, %v899
        %v1232 = vpack.c.b16 %v904, %v900
        %v1233 = vpack.c.b16 %v905, %v901
        %v1234 = vpack.c.b16 %v910, %v906
        %v1235 = vpack.c.b16 %v911, %v907
        %v1236 = vpack.c.b16 %v912, %v908
        %v1237 = vpack.c.b16 %v913, %v909
        %v1238 = vpack.c.b16 %v918, %v914
        %v1239 = vpack.c.b16 %v919, %v915
        %v1240 = vpack.c.b16 %v920, %v916
        %v1241 = vpack.c.b16 %v921, %v917
        %v1242 = vpack.c.b16 %v926, %v922
        %v1243 = vpack.c.b16 %v927, %v923
        %v1244 = vpack.c.b16 %v928, %v924
        %v1245 = vpack.c.b16 %v929, %v925
        %v1246 = vpack.c.b16 %v934, %v930
        %v1247 = vpack.c.b16 %v935, %v931
        %v1248 = vpack.c.b16 %v936, %v932
        %v1249 = vpack.c.b16 %v937, %v933
        %v1250 = vpack.c.b16 %v942, %v938
        %v1251 = vpack.c.b16 %v943, %v939
        %v1252 = vpack.c.b16 %v944, %v940
        %v1253 = vpack.c.b16 %v945, %v941
        %v1254 = vpack.c.b16 %v950, %v946
        %v1255 = vpack.c.b16 %v951, %v947
        %v1256 = vpack.c.b16 %v952, %v948
        %v1257 = vpack.c.b16 %v953, %v949
        %v1258 = vpack.c.b16 %v958, %v954
        %v1259 = vpack.c.b16 %v959, %v955
        %v1260 = vpack.c.b16 %v960, %v956
        %v1261 = vpack.c.b16 %v961, %v957
        %v1262 = vpack.c.b16 %v966, %v962
        %v1263 = vpack.c.b16 %v967, %v963
        %v1264 = vpack.c.b16 %v968, %v964
        %v1265 = vpack.c.b16 %v969, %v965
        %v1266 = vpack.c.b16 %v974, %v970
        %v1267 = vpack.c.b16 %v975, %v971
        %v1268 = vpack.c.b16 %v976, %v972
        %v1269 = vpack.c.b16 %v977, %v973
        %v1270 = vpack.c.b16 %v982, %v978
        %v1271 = vpack.c.b16 %v983, %v979
        %v1272 = vpack.c.b16 %v984, %v980
        %v1273 = vpack.c.b16 %v985, %v981
        %v1274 = vpack.c.b16 %v990, %v986
        %v1275 = vpack.c.b16 %v991, %v987
        %v1276 = vpack.c.b16 %v992, %v988
        %v1277 = vpack.c.b16 %v993, %v989
        %v1278 = vpack.c.b16 %v998, %v994
        %v1279 = vpack.c.b16 %v999, %v995
        %v1280 = vpack.c.b16 %v1000, %v996
        %v1281 = vpack.c.b16 %v1001, %v997
        %v1282 = vpack.c.b16 %v1006, %v1002
        %v1283 = vpack.c.b16 %v1007, %v1003
        %v1284 = vpack.c.b16 %v1008, %v1004
        %v1285 = vpack.c.b16 %v1009, %v1005
        %v1286 = vpack.c.b16 %v1014, %v1010
        %v1287 = vpack.c.b16 %v1015, %v1011
        %v1288 = vpack.c.b16 %v1016, %v1012
        %v1289 = vpack.c.b16 %v1017, %v1013
        %v1290 = vpack.c.b16 %v1022, %v1018
        %v1291 = vpack.c.b16 %v1023, %v1019
        %v1292 = vpack.c.b16 %v1024, %v1020
        %v1293 = vpack.c.b16 %v1025, %v1021
        %v1294 = vpack.c.b16 %v1030, %v1026
        %v1295 = vpack.c.b16 %v1031, %v1027
        %v1296 = vpack.c.b16 %v1032, %v1028
        %v1297 = vpack.c.b16 %v1033, %v1029
        %v1298 = vpack.c.b16 %v1038, %v1034
        %v1299 = vpack.c.b16 %v1039, %v1035
        %v1300 = vpack.c.b16 %v1040, %v1036
        %v1301 = vpack.c.b16 %v1041, %v1037
        %v1302 = vpack.c.b16 %v1046, %v1042
        %v1303 = vpack.c.b16 %v1047, %v1043
        %v1304 = vpack.c.b16 %v1048, %v1044
        %v1305 = vpack.c.b16 %v1049, %v1045
        %v1306 = vpack.c.b16 %v1054, %v1050
        %v1307 = vpack.c.b16 %v1055, %v1051
        %v1308 = vpack.c.b16 %v1056, %v1052
        %v1309 = vpack.c.b16 %v1057, %v1053
        %v1310 = vpack.c.b16 %v1062, %v1058
        %v1311 = vpack.c.b16 %v1063, %v1059
        %v1312 = vpack.c.b16 %v1064, %v1060
        %v1313 = vpack.c.b16 %v1065, %v1061
        %v1314 = vpack.c.b16 %v1070, %v1066
        %v1315 = vpack.c.b16 %v1071, %v1067
        %v1316 = vpack.c.b16 %v1072, %v1068
        %v1317 = vpack.c.b16 %v1073, %v1069
        %v1318 = vpack.c.b16 %v1078, %v1074
        %v1319 = vpack.c.b16 %v1079, %v1075
        %v1320 = vpack.c.b16 %v1080, %v1076
        %v1321 = vpack.c.b16 %v1081, %v1077
        %v1322 = vpack.c.b16 %v1086, %v1082
        %v1323 = vpack.c.b16 %v1087, %v1083
        %v1324 = vpack.c.b16 %v1088, %v1084
        %v1325 = vpack.c.b16 %v1089, %v1085
        %v1326 = vpack.c.b16 %v1094, %v1090
        %v1327 = vpack.c.b16 %v1095, %v1091
        %v1328 = vpack.c.b16 %v1096, %v1092
        %v1329 = vpack.c.b16 %v1097, %v1093
        %v1330 = vpack.c.b16 %v1102, %v1098
        %v1331 = vpack.c.b16 %v1103, %v1099
        %v1332 = vpack.c.b16 %v1104, %v1100
        %v1333 = vpack.c.b16 %v1105, %v1101
        %v1334 = vpack.c.b16 %v1110, %v1106
        %v1335 = vpack.c.b16 %v1111, %v1107
        %v1336 = vpack.c.b16 %v1112, %v1108
        %v1337 = vpack.c.b16 %v1113, %v1109
        %v1338 = vpack.c.b16 %v1118, %v1114
        %v1339 = vpack.c.b16 %v1119, %v1115
        %v1340 = vpack.c.b16 %v1120, %v1116
        %v1341 = vpack.c.b16 %v1121, %v1117
        %v1342 = vpack.c.b16 %v1126, %v1122
        %v1343 = vpack.c.b16 %v1127, %v1123
        %v1344 = vpack.c.b16 %v1128, %v1124
        %v1345 = vpack.c.b16 %v1129, %v1125
        %v1346 = vpack.c.b16 %v1134, %v1130
        %v1347 = vpack.c.b16 %v1135, %v1131
        %v1348 = vpack.c.b16 %v1136, %v1132
        %v1349 = vpack.c.b16 %v1137, %v1133
        %v1350 = vpack.c.b16 %v1142, %v1138
        %v1351 = vpack.c.b16 %v1143, %v1139
        %v1352 = vpack.c.b16 %v1144, %v1140
        %v1353 = vpack.c.b16 %v1145, %v1141
        %v1354 = vpack.c.b16 %v1150, %v1146
        %v1355 = vpack.c.b16 %v1151, %v1147
        %v1356 = vpack.c.b16 %v1152, %v1148
        %v1357 = vpack.c.b16 %v1153, %v1149
        %v1358 = vpack.c.b16 %v1158, %v1154
        %v1359 = vpack.c.b16 %v1159, %v1155
        %v1360 = vpack.c.b16 %v1160, %v1156
        %v1361 = vpack.c.b16 %v1161, %v1157
        %v1362 = vpack.c.b16 %v1166, %v1162
        %v1363 = vpack.c.b16 %v1167, %v1163
        %v1364 = vpack.c.b16 %v1168, %v1164
        %v1365 = vpack.c.b16 %v1169, %v1165
        %v1366 = vpack.c.b16 %v1174, %v1170
        %v1367 = vpack.c.b16 %v1175, %v1171
        %v1368 = vpack.c.b16 %v1176, %v1172
        %v1369 = vpack.c.b16 %v1177, %v1173
        %1562 = vmatpush.bf16.msra.mxu0 %v1206
        %1563 = vmatpush.bf16.msra.mxu0 %v1202
        %1564 = vmatpush.bf16.msra.mxu0 %v1198
        %1565 = vmatpush.bf16.msra.mxu0 %v1194
        %1566 = vmatpush.bf16.msra.mxu0 %v1190
        %1567 = vmatpush.bf16.msra.mxu0 %v1186
        %1568 = vmatpush.bf16.msra.mxu0 %v1182
        %1569 = vmatpush.bf16.msra.mxu0 %v1178
        %1570 = vmatmul.bf16.gmra.mxu0 %v590
        %v1571 = vpop.f32.mrf.mxu0
        %v1572 = vadd.f32 %v573, %v1571
        %v1573 = vpop.f32.mrf.mxu0
        %1574 = vdwg.mxu0
        %1575 = vmatpush.bf16.msra.mxu0 %v1238
        %1576 = vmatpush.bf16.msra.mxu0 %v1234
        %1577 = vmatpush.bf16.msra.mxu0 %v1230
        %1578 = vmatpush.bf16.msra.mxu0 %v1226
        %1579 = vmatpush.bf16.msra.mxu0 %v1222
        %1580 = vmatpush.bf16.msra.mxu0 %v1218
        %1581 = vmatpush.bf16.msra.mxu0 %v1214
        %1582 = vmatpush.bf16.msra.mxu0 %v1210
        %1583 = vmatmul.bf16.gmra.mxu0 %v591
        %v1584 = vpop.f32.mrf.mxu0
        %v1585 = vadd.f32 %v1572, %v1584
        %v1586 = vpop.f32.mrf.mxu0
        %1587 = vdwg.mxu0
        %1588 = vmatpush.bf16.msra.mxu0 %v1270
        %1589 = vmatpush.bf16.msra.mxu0 %v1266
        %1590 = vmatpush.bf16.msra.mxu0 %v1262
        %1591 = vmatpush.bf16.msra.mxu0 %v1258
        %1592 = vmatpush.bf16.msra.mxu0 %v1254
        %1593 = vmatpush.bf16.msra.mxu0 %v1250
        %1594 = vmatpush.bf16.msra.mxu0 %v1246
        %1595 = vmatpush.bf16.msra.mxu0 %v1242
        %1596 = vmatmul.bf16.gmra.mxu0 %v592
        %v1597 = vpop.f32.mrf.mxu0
        %v1598 = vadd.f32 %v1585, %v1597
        %v1599 = vpop.f32.mrf.mxu0
        %1600 = vdwg.mxu0
        %1601 = vmatpush.bf16.msra.mxu0 %v1302
        %1602 = vmatpush.bf16.msra.mxu0 %v1298
        %1603 = vmatpush.bf16.msra.mxu0 %v1294
        %1604 = vmatpush.bf16.msra.mxu0 %v1290
        %1605 = vmatpush.bf16.msra.mxu0 %v1286
        %1606 = vmatpush.bf16.msra.mxu0 %v1282
        %1607 = vmatpush.bf16.msra.mxu0 %v1278
        %1608 = vmatpush.bf16.msra.mxu0 %v1274
        %1609 = vmatmul.bf16.gmra.mxu0 %v593
        %v1610 = vpop.f32.mrf.mxu0
        %v1611 = vadd.f32 %v1598, %v1610
        %v1612 = vpop.f32.mrf.mxu0
        %1613 = vdwg.mxu0
        %1614 = vmatpush.bf16.msra.mxu0 %v1334
        %1615 = vmatpush.bf16.msra.mxu0 %v1330
        %1616 = vmatpush.bf16.msra.mxu0 %v1326
        %1617 = vmatpush.bf16.msra.mxu0 %v1322
        %1618 = vmatpush.bf16.msra.mxu0 %v1318
        %1619 = vmatpush.bf16.msra.mxu0 %v1314
        %1620 = vmatpush.bf16.msra.mxu0 %v1310
        %1621 = vmatpush.bf16.msra.mxu0 %v1306
        %1622 = vmatmul.bf16.gmra.mxu0 %v594
        %v1623 = vpop.f32.mrf.mxu0
        %v1624 = vadd.f32 %v1611, %v1623
        %v1625 = vpop.f32.mrf.mxu0
        %1626 = vdwg.mxu0
        %1627 = vmatpush.bf16.msra.mxu0 %v1366
        %1628 = vmatpush.bf16.msra.mxu0 %v1362
        %1629 = vmatpush.bf16.msra.mxu0 %v1358
        %1630 = vmatpush.bf16.msra.mxu0 %v1354
        %1631 = vmatpush.bf16.msra.mxu0 %v1350
        %1632 = vmatpush.bf16.msra.mxu0 %v1346
        %1633 = vmatpush.bf16.msra.mxu0 %v1342
        %1634 = vmatpush.bf16.msra.mxu0 %v1338
        %1635 = vmatmul.bf16.gmra.mxu0 %v595
        %v1636 = vpop.f32.mrf.mxu0
        %v1637 = vadd.f32 %v1624, %v1636
        %v1638 = vpop.f32.mrf.mxu0
        %1639 = vdwg.mxu0
        %1640 = vmatpush.bf16.msra.mxu0 %v1207
        %1641 = vmatpush.bf16.msra.mxu0 %v1203
        %1642 = vmatpush.bf16.msra.mxu0 %v1199
        %1643 = vmatpush.bf16.msra.mxu0 %v1195
        %1644 = vmatpush.bf16.msra.mxu0 %v1191
        %1645 = vmatpush.bf16.msra.mxu0 %v1187
        %1646 = vmatpush.bf16.msra.mxu0 %v1183
        %1647 = vmatpush.bf16.msra.mxu0 %v1179
        %1648 = vmatmul.bf16.gmra.mxu0 %v590
        %v1649 = vpop.f32.mrf.mxu0
        %v1650 = vadd.f32 %v574, %v1649
        %v1651 = vpop.f32.mrf.mxu0
        %1652 = vdwg.mxu0
        %1653 = vmatpush.bf16.msra.mxu0 %v1239
        %1654 = vmatpush.bf16.msra.mxu0 %v1235
        %1655 = vmatpush.bf16.msra.mxu0 %v1231
        %1656 = vmatpush.bf16.msra.mxu0 %v1227
        %1657 = vmatpush.bf16.msra.mxu0 %v1223
        %1658 = vmatpush.bf16.msra.mxu0 %v1219
        %1659 = vmatpush.bf16.msra.mxu0 %v1215
        %1660 = vmatpush.bf16.msra.mxu0 %v1211
        %1661 = vmatmul.bf16.gmra.mxu0 %v591
        %v1662 = vpop.f32.mrf.mxu0
        %v1663 = vadd.f32 %v1650, %v1662
        %v1664 = vpop.f32.mrf.mxu0
        %1665 = vdwg.mxu0
        %1666 = vmatpush.bf16.msra.mxu0 %v1271
        %1667 = vmatpush.bf16.msra.mxu0 %v1267
        %1668 = vmatpush.bf16.msra.mxu0 %v1263
        %1669 = vmatpush.bf16.msra.mxu0 %v1259
        %1670 = vmatpush.bf16.msra.mxu0 %v1255
        %1671 = vmatpush.bf16.msra.mxu0 %v1251
        %1672 = vmatpush.bf16.msra.mxu0 %v1247
        %1673 = vmatpush.bf16.msra.mxu0 %v1243
        %1674 = vmatmul.bf16.gmra.mxu0 %v592
        %v1675 = vpop.f32.mrf.mxu0
        %v1676 = vadd.f32 %v1663, %v1675
        %v1677 = vpop.f32.mrf.mxu0
        %1678 = vdwg.mxu0
        %1679 = vmatpush.bf16.msra.mxu0 %v1303
        %1680 = vmatpush.bf16.msra.mxu0 %v1299
        %1681 = vmatpush.bf16.msra.mxu0 %v1295
        %1682 = vmatpush.bf16.msra.mxu0 %v1291
        %1683 = vmatpush.bf16.msra.mxu0 %v1287
        %1684 = vmatpush.bf16.msra.mxu0 %v1283
        %1685 = vmatpush.bf16.msra.mxu0 %v1279
        %1686 = vmatpush.bf16.msra.mxu0 %v1275
        %1687 = vmatmul.bf16.gmra.mxu0 %v593
        %v1688 = vpop.f32.mrf.mxu0
        %v1689 = vadd.f32 %v1676, %v1688
        %v1690 = vpop.f32.mrf.mxu0
        %1691 = vdwg.mxu0
        %1692 = vmatpush.bf16.msra.mxu0 %v1335
        %1693 = vmatpush.bf16.msra.mxu0 %v1331
        %1694 = vmatpush.bf16.msra.mxu0 %v1327
        %1695 = vmatpush.bf16.msra.mxu0 %v1323
        %1696 = vmatpush.bf16.msra.mxu0 %v1319
        %1697 = vmatpush.bf16.msra.mxu0 %v1315
        %1698 = vmatpush.bf16.msra.mxu0 %v1311
        %1699 = vmatpush.bf16.msra.mxu0 %v1307
        %1700 = vmatmul.bf16.gmra.mxu0 %v594
        %v1701 = vpop.f32.mrf.mxu0
        %v1702 = vadd.f32 %v1689, %v1701
        %v1703 = vpop.f32.mrf.mxu0
        %1704 = vdwg.mxu0
        %1705 = vmatpush.bf16.msra.mxu0 %v1367
        %1706 = vmatpush.bf16.msra.mxu0 %v1363
        %1707 = vmatpush.bf16.msra.mxu0 %v1359
        %1708 = vmatpush.bf16.msra.mxu0 %v1355
        %1709 = vmatpush.bf16.msra.mxu0 %v1351
        %1710 = vmatpush.bf16.msra.mxu0 %v1347
        %1711 = vmatpush.bf16.msra.mxu0 %v1343
        %1712 = vmatpush.bf16.msra.mxu0 %v1339
        %1713 = vmatmul.bf16.gmra.mxu0 %v595
        %v1714 = vpop.f32.mrf.mxu0
        %v1715 = vadd.f32 %v1702, %v1714
        %v1716 = vpop.f32.mrf.mxu0
        %1717 = vdwg.mxu0
        %1718 = vmatpush.bf16.msra.mxu0 %v1208
        %1719 = vmatpush.bf16.msra.mxu0 %v1204
        %1720 = vmatpush.bf16.msra.mxu0 %v1200
        %1721 = vmatpush.bf16.msra.mxu0 %v1196
        %1722 = vmatpush.bf16.msra.mxu0 %v1192
        %1723 = vmatpush.bf16.msra.mxu0 %v1188
        %1724 = vmatpush.bf16.msra.mxu0 %v1184
        %1725 = vmatpush.bf16.msra.mxu0 %v1180
        %1726 = vmatmul.bf16.gmra.mxu0 %v590
        %v1727 = vpop.f32.mrf.mxu0
        %v1728 = vadd.f32 %v575, %v1727
        %v1729 = vpop.f32.mrf.mxu0
        %1730 = vdwg.mxu0
        %1731 = vmatpush.bf16.msra.mxu0 %v1240
        %1732 = vmatpush.bf16.msra.mxu0 %v1236
        %1733 = vmatpush.bf16.msra.mxu0 %v1232
        %1734 = vmatpush.bf16.msra.mxu0 %v1228
        %1735 = vmatpush.bf16.msra.mxu0 %v1224
        %1736 = vmatpush.bf16.msra.mxu0 %v1220
        %1737 = vmatpush.bf16.msra.mxu0 %v1216
        %1738 = vmatpush.bf16.msra.mxu0 %v1212
        %1739 = vmatmul.bf16.gmra.mxu0 %v591
        %v1740 = vpop.f32.mrf.mxu0
        %v1741 = vadd.f32 %v1728, %v1740
        %v1742 = vpop.f32.mrf.mxu0
        %1743 = vdwg.mxu0
        %1744 = vmatpush.bf16.msra.mxu0 %v1272
        %1745 = vmatpush.bf16.msra.mxu0 %v1268
        %1746 = vmatpush.bf16.msra.mxu0 %v1264
        %1747 = vmatpush.bf16.msra.mxu0 %v1260
        %1748 = vmatpush.bf16.msra.mxu0 %v1256
        %1749 = vmatpush.bf16.msra.mxu0 %v1252
        %1750 = vmatpush.bf16.msra.mxu0 %v1248
        %1751 = vmatpush.bf16.msra.mxu0 %v1244
        %1752 = vmatmul.bf16.gmra.mxu0 %v592
        %v1753 = vpop.f32.mrf.mxu0
        %v1754 = vadd.f32 %v1741, %v1753
        %v1755 = vpop.f32.mrf.mxu0
        %1756 = vdwg.mxu0
        %1757 = vmatpush.bf16.msra.mxu0 %v1304
        %1758 = vmatpush.bf16.msra.mxu0 %v1300
        %1759 = vmatpush.bf16.msra.mxu0 %v1296
        %1760 = vmatpush.bf16.msra.mxu0 %v1292
        %1761 = vmatpush.bf16.msra.mxu0 %v1288
        %1762 = vmatpush.bf16.msra.mxu0 %v1284
        %1763 = vmatpush.bf16.msra.mxu0 %v1280
        %1764 = vmatpush.bf16.msra.mxu0 %v1276
        %1765 = vmatmul.bf16.gmra.mxu0 %v593
        %v1766 = vpop.f32.mrf.mxu0
        %v1767 = vadd.f32 %v1754, %v1766
        %v1768 = vpop.f32.mrf.mxu0
        %1769 = vdwg.mxu0
        %1770 = vmatpush.bf16.msra.mxu0 %v1336
        %1771 = vmatpush.bf16.msra.mxu0 %v1332
        %1772 = vmatpush.bf16.msra.mxu0 %v1328
        %1773 = vmatpush.bf16.msra.mxu0 %v1324
        %1774 = vmatpush.bf16.msra.mxu0 %v1320
        %1775 = vmatpush.bf16.msra.mxu0 %v1316
        %1776 = vmatpush.bf16.msra.mxu0 %v1312
        %1777 = vmatpush.bf16.msra.mxu0 %v1308
        %1778 = vmatmul.bf16.gmra.mxu0 %v594
        %v1779 = vpop.f32.mrf.mxu0
        %v1780 = vadd.f32 %v1767, %v1779
        %v1781 = vpop.f32.mrf.mxu0
        %1782 = vdwg.mxu0
        %1783 = vmatpush.bf16.msra.mxu0 %v1368
        %1784 = vmatpush.bf16.msra.mxu0 %v1364
        %1785 = vmatpush.bf16.msra.mxu0 %v1360
        %1786 = vmatpush.bf16.msra.mxu0 %v1356
        %1787 = vmatpush.bf16.msra.mxu0 %v1352
        %1788 = vmatpush.bf16.msra.mxu0 %v1348
        %1789 = vmatpush.bf16.msra.mxu0 %v1344
        %1790 = vmatpush.bf16.msra.mxu0 %v1340
        %1791 = vmatmul.bf16.gmra.mxu0 %v595
        %v1792 = vpop.f32.mrf.mxu0
        %v1793 = vadd.f32 %v1780, %v1792
        %v1794 = vpop.f32.mrf.mxu0
        %1795 = vdwg.mxu0
        %1796 = vmatpush.bf16.msra.mxu0 %v1209
        %1797 = vmatpush.bf16.msra.mxu0 %v1205
        %1798 = vmatpush.bf16.msra.mxu0 %v1201
        %1799 = vmatpush.bf16.msra.mxu0 %v1197
        %1800 = vmatpush.bf16.msra.mxu0 %v1193
        %1801 = vmatpush.bf16.msra.mxu0 %v1189
        %1802 = vmatpush.bf16.msra.mxu0 %v1185
        %1803 = vmatpush.bf16.msra.mxu0 %v1181
        %1804 = vmatmul.bf16.gmra.mxu0 %v590
        %v1805 = vpop.f32.mrf.mxu0
        %v1806 = vadd.f32 %v576, %v1805
        %v1807 = vpop.f32.mrf.mxu0
        %1808 = vdwg.mxu0
        %1809 = vmatpush.bf16.msra.mxu0 %v1241
        %1810 = vmatpush.bf16.msra.mxu0 %v1237
        %1811 = vmatpush.bf16.msra.mxu0 %v1233
        %1812 = vmatpush.bf16.msra.mxu0 %v1229
        %1813 = vmatpush.bf16.msra.mxu0 %v1225
        %1814 = vmatpush.bf16.msra.mxu0 %v1221
        %1815 = vmatpush.bf16.msra.mxu0 %v1217
        %1816 = vmatpush.bf16.msra.mxu0 %v1213
        %1817 = vmatmul.bf16.gmra.mxu0 %v591
        %v1818 = vpop.f32.mrf.mxu0
        %v1819 = vadd.f32 %v1806, %v1818
        %v1820 = vpop.f32.mrf.mxu0
        %1821 = vdwg.mxu0
        %1822 = vmatpush.bf16.msra.mxu0 %v1273
        %1823 = vmatpush.bf16.msra.mxu0 %v1269
        %1824 = vmatpush.bf16.msra.mxu0 %v1265
        %1825 = vmatpush.bf16.msra.mxu0 %v1261
        %1826 = vmatpush.bf16.msra.mxu0 %v1257
        %1827 = vmatpush.bf16.msra.mxu0 %v1253
        %1828 = vmatpush.bf16.msra.mxu0 %v1249
        %1829 = vmatpush.bf16.msra.mxu0 %v1245
        %1830 = vmatmul.bf16.gmra.mxu0 %v592
        %v1831 = vpop.f32.mrf.mxu0
        %v1832 = vadd.f32 %v1819, %v1831
        %v1833 = vpop.f32.mrf.mxu0
        %1834 = vdwg.mxu0
        %1835 = vmatpush.bf16.msra.mxu0 %v1305
        %1836 = vmatpush.bf16.msra.mxu0 %v1301
        %1837 = vmatpush.bf16.msra.mxu0 %v1297
        %1838 = vmatpush.bf16.msra.mxu0 %v1293
        %1839 = vmatpush.bf16.msra.mxu0 %v1289
        %1840 = vmatpush.bf16.msra.mxu0 %v1285
        %1841 = vmatpush.bf16.msra.mxu0 %v1281
        %1842 = vmatpush.bf16.msra.mxu0 %v1277
        %1843 = vmatmul.bf16.gmra.mxu0 %v593
        %v1844 = vpop.f32.mrf.mxu0
        %v1845 = vadd.f32 %v1832, %v1844
        %v1846 = vpop.f32.mrf.mxu0
        %1847 = vdwg.mxu0
        %1848 = vmatpush.bf16.msra.mxu0 %v1337
        %1849 = vmatpush.bf16.msra.mxu0 %v1333
        %1850 = vmatpush.bf16.msra.mxu0 %v1329
        %1851 = vmatpush.bf16.msra.mxu0 %v1325
        %1852 = vmatpush.bf16.msra.mxu0 %v1321
        %1853 = vmatpush.bf16.msra.mxu0 %v1317
        %1854 = vmatpush.bf16.msra.mxu0 %v1313
        %1855 = vmatpush.bf16.msra.mxu0 %v1309
        %1856 = vmatmul.bf16.gmra.mxu0 %v594
        %v1857 = vpop.f32.mrf.mxu0
        %v1858 = vadd.f32 %v1845, %v1857
        %v1859 = vpop.f32.mrf.mxu0
        %1860 = vdwg.mxu0
        %1861 = vmatpush.bf16.msra.mxu0 %v1369
        %1862 = vmatpush.bf16.msra.mxu0 %v1365
        %1863 = vmatpush.bf16.msra.mxu0 %v1361
        %1864 = vmatpush.bf16.msra.mxu0 %v1357
        %1865 = vmatpush.bf16.msra.mxu0 %v1353
        %1866 = vmatpush.bf16.msra.mxu0 %v1349
        %1867 = vmatpush.bf16.msra.mxu0 %v1345
        %1868 = vmatpush.bf16.msra.mxu0 %v1341
        %1869 = vmatmul.bf16.gmra.mxu0 %v595
        %v1870 = vpop.f32.mrf.mxu0
        %v1871 = vadd.f32 %v1858, %v1870
        %v1872 = vpop.f32.mrf.mxu0
        %1873 = vdwg.mxu0
        %v1874 = vmax.f32 %v1637, 0.0
        %v1875 = vmax.f32 %v1715, 0.0
        %v1876 = vmax.f32 %v1793, 0.0
        %v1877 = vmax.f32 %v1871, 0.0
        %v1878 = vpack.c.bf16 %v1874, %v1874
        %v1879 = vpack.c.bf16 %v1875, %v1875
        %v1880 = vpack.c.bf16 %v1876, %v1876
        %v1881 = vpack.c.bf16 %v1877, %v1877
        %v1882 = vld [vmem:[#allocation8] sm:$0xff]
        %v1883 = vld [vmem:[#allocation8 + $0x8] sm:$0xff]
        %v1884 = vld [vmem:[#allocation8 + $0x10] sm:$0xff]
        %v1885 = vld [vmem:[#allocation8 + $0x18] sm:$0xff]
        %v1886 = vld [vmem:[#allocation8 + $0x20] sm:$0xff]
        %v1887 = vld [vmem:[#allocation8 + $0x28] sm:$0xff]
        %v1888 = vld [vmem:[#allocation8 + $0x30] sm:$0xff]
        %v1889 = vld [vmem:[#allocation8 + $0x38] sm:$0xff]
        %v1890 = vld [vmem:[#allocation8 + $0x40] sm:$0xff]
        %v1891 = vld [vmem:[#allocation8 + $0x48] sm:$0xff]
        %v1892 = vld [vmem:[#allocation8 + $0x50] sm:$0xff]
        %v1893 = vld [vmem:[#allocation8 + $0x58] sm:$0xff]
        %v1894 = vld [vmem:[#allocation8 + $0x60] sm:$0xff]
        %v1895 = vld [vmem:[#allocation8 + $0x68] sm:$0xff]
        %v1896 = vld [vmem:[#allocation8 + $0x70] sm:$0xff]
        %v1897 = vld [vmem:[#allocation8 + $0x78] sm:$0xff]
        %v1898 = vld [vmem:[#allocation8 + $0x80] sm:$0xff]
        %v1899 = vld [vmem:[#allocation8 + $0x88] sm:$0xff]
        %v1900 = vld [vmem:[#allocation8 + $0x90] sm:$0xff]
        %v1901 = vld [vmem:[#allocation8 + $0x98] sm:$0xff]
        %v1902 = vld [vmem:[#allocation8 + $0xa0] sm:$0xff]
        %v1903 = vld [vmem:[#allocation8 + $0xa8] sm:$0xff]
        %v1904 = vld [vmem:[#allocation8 + $0xb0] sm:$0xff]
        %v1905 = vld [vmem:[#allocation8 + $0xb8] sm:$0xff]
        %v1906 = vld [vmem:[#allocation8 + $0xc0] sm:$0xff]
        %v1907 = vld [vmem:[#allocation8 + $0xc8] sm:$0xff]
        %v1908 = vld [vmem:[#allocation8 + $0xd0] sm:$0xff]
        %v1909 = vld [vmem:[#allocation8 + $0xd8] sm:$0xff]
        %v1910 = vld [vmem:[#allocation8 + $0xe0] sm:$0xff]
        %v1911 = vld [vmem:[#allocation8 + $0xe8] sm:$0xff]
        %v1912 = vld [vmem:[#allocation8 + $0xf0] sm:$0xff]
        %v1913 = vld [vmem:[#allocation8 + $0xf8] sm:$0xff]
        %v1914 = vld [vmem:[#allocation8 + $0x100] sm:$0xff]
        %v1915 = vld [vmem:[#allocation8 + $0x108] sm:$0xff]
        %v1916 = vld [vmem:[#allocation8 + $0x110] sm:$0xff]
        %v1917 = vld [vmem:[#allocation8 + $0x118] sm:$0xff]
        %v1918 = vld [vmem:[#allocation8 + $0x120] sm:$0xff]
        %v1919 = vld [vmem:[#allocation8 + $0x128] sm:$0xff]
        %v1920 = vld [vmem:[#allocation8 + $0x130] sm:$0xff]
        %v1921 = vld [vmem:[#allocation8 + $0x138] sm:$0xff]
        %v1922 = vld [vmem:[#allocation8 + $0x140] sm:$0xff]
        %v1923 = vld [vmem:[#allocation8 + $0x148] sm:$0xff]
        %v1924 = vld [vmem:[#allocation8 + $0x150] sm:$0xff]
        %v1925 = vld [vmem:[#allocation8 + $0x158] sm:$0xff]
        %v1926 = vld [vmem:[#allocation8 + $0x160] sm:$0xff]
        %v1927 = vld [vmem:[#allocation8 + $0x168] sm:$0xff]
        %v1928 = vld [vmem:[#allocation8 + $0x170] sm:$0xff]
        %v1929 = vld [vmem:[#allocation8 + $0x178] sm:$0xff]
        %v1930 = vld [vmem:[#allocation8 + $0x180] sm:$0xff]
        %v1931 = vld [vmem:[#allocation8 + $0x188] sm:$0xff]
        %v1932 = vld [vmem:[#allocation8 + $0x190] sm:$0xff]
        %v1933 = vld [vmem:[#allocation8 + $0x198] sm:$0xff]
        %v1934 = vld [vmem:[#allocation8 + $0x1a0] sm:$0xff]
        %v1935 = vld [vmem:[#allocation8 + $0x1a8] sm:$0xff]
        %v1936 = vld [vmem:[#allocation8 + $0x1b0] sm:$0xff]
        %v1937 = vld [vmem:[#allocation8 + $0x1b8] sm:$0xff]
        %v1938 = vld [vmem:[#allocation8 + $0x1c0] sm:$0xff]
        %v1939 = vld [vmem:[#allocation8 + $0x1c8] sm:$0xff]
        %v1940 = vld [vmem:[#allocation8 + $0x1d0] sm:$0xff]
        %v1941 = vld [vmem:[#allocation8 + $0x1d8] sm:$0xff]
        %v1942 = vld [vmem:[#allocation8 + $0x1e0] sm:$0xff]
        %v1943 = vld [vmem:[#allocation8 + $0x1e8] sm:$0xff]
        %v1944 = vld [vmem:[#allocation8 + $0x1f0] sm:$0xff]
        %v1945 = vld [vmem:[#allocation8 + $0x1f8] sm:$0xff]
        %v1946 = vld [vmem:[#allocation8 + $0x200] sm:$0xff]
        %v1947 = vld [vmem:[#allocation8 + $0x208] sm:$0xff]
        %v1948 = vld [vmem:[#allocation8 + $0x210] sm:$0xff]
        %v1949 = vld [vmem:[#allocation8 + $0x218] sm:$0xff]
        %v1950 = vld [vmem:[#allocation8 + $0x220] sm:$0xff]
        %v1951 = vld [vmem:[#allocation8 + $0x228] sm:$0xff]
        %v1952 = vld [vmem:[#allocation8 + $0x230] sm:$0xff]
        %v1953 = vld [vmem:[#allocation8 + $0x238] sm:$0xff]
        %v1954 = vld [vmem:[#allocation8 + $0x240] sm:$0xff]
        %v1955 = vld [vmem:[#allocation8 + $0x248] sm:$0xff]
        %v1956 = vld [vmem:[#allocation8 + $0x250] sm:$0xff]
        %v1957 = vld [vmem:[#allocation8 + $0x258] sm:$0xff]
        %v1958 = vld [vmem:[#allocation8 + $0x260] sm:$0xff]
        %v1959 = vld [vmem:[#allocation8 + $0x268] sm:$0xff]
        %v1960 = vld [vmem:[#allocation8 + $0x270] sm:$0xff]
        %v1961 = vld [vmem:[#allocation8 + $0x278] sm:$0xff]
        %v1962 = vld [vmem:[#allocation8 + $0x280] sm:$0xff]
        %v1963 = vld [vmem:[#allocation8 + $0x288] sm:$0xff]
        %v1964 = vld [vmem:[#allocation8 + $0x290] sm:$0xff]
        %v1965 = vld [vmem:[#allocation8 + $0x298] sm:$0xff]
        %v1966 = vld [vmem:[#allocation8 + $0x2a0] sm:$0xff]
        %v1967 = vld [vmem:[#allocation8 + $0x2a8] sm:$0xff]
        %v1968 = vld [vmem:[#allocation8 + $0x2b0] sm:$0xff]
        %v1969 = vld [vmem:[#allocation8 + $0x2b8] sm:$0xff]
        %v1970 = vld [vmem:[#allocation8 + $0x2c0] sm:$0xff]
        %v1971 = vld [vmem:[#allocation8 + $0x2c8] sm:$0xff]
        %v1972 = vld [vmem:[#allocation8 + $0x2d0] sm:$0xff]
        %v1973 = vld [vmem:[#allocation8 + $0x2d8] sm:$0xff]
        %v1974 = vld [vmem:[#allocation8 + $0x2e0] sm:$0xff]
        %v1975 = vld [vmem:[#allocation8 + $0x2e8] sm:$0xff]
        %v1976 = vld [vmem:[#allocation8 + $0x2f0] sm:$0xff]
        %v1977 = vld [vmem:[#allocation8 + $0x2f8] sm:$0xff]
        %v1978 = vld [vmem:[#allocation8 + $0x300] sm:$0xff]
        %v1979 = vld [vmem:[#allocation8 + $0x308] sm:$0xff]
        %v1980 = vld [vmem:[#allocation8 + $0x310] sm:$0xff]
        %v1981 = vld [vmem:[#allocation8 + $0x318] sm:$0xff]
        %v1982 = vld [vmem:[#allocation8 + $0x320] sm:$0xff]
        %v1983 = vld [vmem:[#allocation8 + $0x328] sm:$0xff]
        %v1984 = vld [vmem:[#allocation8 + $0x330] sm:$0xff]
        %v1985 = vld [vmem:[#allocation8 + $0x338] sm:$0xff]
        %v1986 = vld [vmem:[#allocation8 + $0x340] sm:$0xff]
        %v1987 = vld [vmem:[#allocation8 + $0x348] sm:$0xff]
        %v1988 = vld [vmem:[#allocation8 + $0x350] sm:$0xff]
        %v1989 = vld [vmem:[#allocation8 + $0x358] sm:$0xff]
        %v1990 = vld [vmem:[#allocation8 + $0x360] sm:$0xff]
        %v1991 = vld [vmem:[#allocation8 + $0x368] sm:$0xff]
        %v1992 = vld [vmem:[#allocation8 + $0x370] sm:$0xff]
        %v1993 = vld [vmem:[#allocation8 + $0x378] sm:$0xff]
        %v1994 = vld [vmem:[#allocation8 + $0x380] sm:$0xff]
        %v1995 = vld [vmem:[#allocation8 + $0x388] sm:$0xff]
        %v1996 = vld [vmem:[#allocation8 + $0x390] sm:$0xff]
        %v1997 = vld [vmem:[#allocation8 + $0x398] sm:$0xff]
        %v1998 = vld [vmem:[#allocation8 + $0x3a0] sm:$0xff]
        %v1999 = vld [vmem:[#allocation8 + $0x3a8] sm:$0xff]
        %v2000 = vld [vmem:[#allocation8 + $0x3b0] sm:$0xff]
        %v2001 = vld [vmem:[#allocation8 + $0x3b8] sm:$0xff]
        %v2002 = vld [vmem:[#allocation8 + $0x3c0] sm:$0xff]
        %v2003 = vld [vmem:[#allocation8 + $0x3c8] sm:$0xff]
        %v2004 = vld [vmem:[#allocation8 + $0x3d0] sm:$0xff]
        %v2005 = vld [vmem:[#allocation8 + $0x3d8] sm:$0xff]
        %v2006 = vld [vmem:[#allocation8 + $0x3e0] sm:$0xff]
        %v2007 = vld [vmem:[#allocation8 + $0x3e8] sm:$0xff]
        %v2008 = vld [vmem:[#allocation8 + $0x3f0] sm:$0xff]
        %v2009 = vld [vmem:[#allocation8 + $0x3f8] sm:$0xff]
        %v2010 = vld [vmem:[#allocation10] sm:$0xf]
        %v2012 = vperm.slane %v2010, 0
        %v2013 = vperm.slane %v2010, 1
        %v2014 = vperm.slane %v2010, 2
        %v2015 = vperm.slane %v2010, 3
        %v2148 = vunpack.c.l.b16 %v1882
        %v2149 = vunpack.c.h.b16 %v1882
        %v2150 = vunpack.c.l.b16 %v1883
        %v2151 = vunpack.c.h.b16 %v1883
        %v2152 = vunpack.c.l.b16 %v1884
        %v2153 = vunpack.c.h.b16 %v1884
        %v2154 = vunpack.c.l.b16 %v1885
        %v2155 = vunpack.c.h.b16 %v1885
        %v2156 = vunpack.c.l.b16 %v1886
        %v2157 = vunpack.c.h.b16 %v1886
        %v2158 = vunpack.c.l.b16 %v1887
        %v2159 = vunpack.c.h.b16 %v1887
        %v2160 = vunpack.c.l.b16 %v1888
        %v2161 = vunpack.c.h.b16 %v1888
        %v2162 = vunpack.c.l.b16 %v1889
        %v2163 = vunpack.c.h.b16 %v1889
        %v2164 = vunpack.c.l.b16 %v1890
        %v2165 = vunpack.c.h.b16 %v1890
        %v2166 = vunpack.c.l.b16 %v1891
        %v2167 = vunpack.c.h.b16 %v1891
        %v2168 = vunpack.c.l.b16 %v1892
        %v2169 = vunpack.c.h.b16 %v1892
        %v2170 = vunpack.c.l.b16 %v1893
        %v2171 = vunpack.c.h.b16 %v1893
        %v2172 = vunpack.c.l.b16 %v1894
        %v2173 = vunpack.c.h.b16 %v1894
        %v2174 = vunpack.c.l.b16 %v1895
        %v2175 = vunpack.c.h.b16 %v1895
        %v2176 = vunpack.c.l.b16 %v1896
        %v2177 = vunpack.c.h.b16 %v1896
        %v2178 = vunpack.c.l.b16 %v1897
        %v2179 = vunpack.c.h.b16 %v1897
        %v2180 = vunpack.c.l.b16 %v1898
        %v2181 = vunpack.c.h.b16 %v1898
        %v2182 = vunpack.c.l.b16 %v1899
        %v2183 = vunpack.c.h.b16 %v1899
        %v2184 = vunpack.c.l.b16 %v1900
        %v2185 = vunpack.c.h.b16 %v1900
        %v2186 = vunpack.c.l.b16 %v1901
        %v2187 = vunpack.c.h.b16 %v1901
        %v2188 = vunpack.c.l.b16 %v1902
        %v2189 = vunpack.c.h.b16 %v1902
        %v2190 = vunpack.c.l.b16 %v1903
        %v2191 = vunpack.c.h.b16 %v1903
        %v2192 = vunpack.c.l.b16 %v1904
        %v2193 = vunpack.c.h.b16 %v1904
        %v2194 = vunpack.c.l.b16 %v1905
        %v2195 = vunpack.c.h.b16 %v1905
        %v2196 = vunpack.c.l.b16 %v1906
        %v2197 = vunpack.c.h.b16 %v1906
        %v2198 = vunpack.c.l.b16 %v1907
        %v2199 = vunpack.c.h.b16 %v1907
        %v2200 = vunpack.c.l.b16 %v1908
        %v2201 = vunpack.c.h.b16 %v1908
        %v2202 = vunpack.c.l.b16 %v1909
        %v2203 = vunpack.c.h.b16 %v1909
        %v2204 = vunpack.c.l.b16 %v1910
        %v2205 = vunpack.c.h.b16 %v1910
        %v2206 = vunpack.c.l.b16 %v1911
        %v2207 = vunpack.c.h.b16 %v1911
        %v2208 = vunpack.c.l.b16 %v1912
        %v2209 = vunpack.c.h.b16 %v1912
        %v2210 = vunpack.c.l.b16 %v1913
        %v2211 = vunpack.c.h.b16 %v1913
        %v2212 = vunpack.c.l.b16 %v1914
        %v2213 = vunpack.c.h.b16 %v1914
        %v2214 = vunpack.c.l.b16 %v1915
        %v2215 = vunpack.c.h.b16 %v1915
        %v2216 = vunpack.c.l.b16 %v1916
        %v2217 = vunpack.c.h.b16 %v1916
        %v2218 = vunpack.c.l.b16 %v1917
        %v2219 = vunpack.c.h.b16 %v1917
        %v2220 = vunpack.c.l.b16 %v1918
        %v2221 = vunpack.c.h.b16 %v1918
        %v2222 = vunpack.c.l.b16 %v1919
        %v2223 = vunpack.c.h.b16 %v1919
        %v2224 = vunpack.c.l.b16 %v1920
        %v2225 = vunpack.c.h.b16 %v1920
        %v2226 = vunpack.c.l.b16 %v1921
        %v2227 = vunpack.c.h.b16 %v1921
        %v2228 = vunpack.c.l.b16 %v1922
        %v2229 = vunpack.c.h.b16 %v1922
        %v2230 = vunpack.c.l.b16 %v1923
        %v2231 = vunpack.c.h.b16 %v1923
        %v2232 = vunpack.c.l.b16 %v1924
        %v2233 = vunpack.c.h.b16 %v1924
        %v2234 = vunpack.c.l.b16 %v1925
        %v2235 = vunpack.c.h.b16 %v1925
        %v2236 = vunpack.c.l.b16 %v1926
        %v2237 = vunpack.c.h.b16 %v1926
        %v2238 = vunpack.c.l.b16 %v1927
        %v2239 = vunpack.c.h.b16 %v1927
        %v2240 = vunpack.c.l.b16 %v1928
        %v2241 = vunpack.c.h.b16 %v1928
        %v2242 = vunpack.c.l.b16 %v1929
        %v2243 = vunpack.c.h.b16 %v1929
        %v2244 = vunpack.c.l.b16 %v1930
        %v2245 = vunpack.c.h.b16 %v1930
        %v2246 = vunpack.c.l.b16 %v1931
        %v2247 = vunpack.c.h.b16 %v1931
        %v2248 = vunpack.c.l.b16 %v1932
        %v2249 = vunpack.c.h.b16 %v1932
        %v2250 = vunpack.c.l.b16 %v1933
        %v2251 = vunpack.c.h.b16 %v1933
        %v2252 = vunpack.c.l.b16 %v1934
        %v2253 = vunpack.c.h.b16 %v1934
        %v2254 = vunpack.c.l.b16 %v1935
        %v2255 = vunpack.c.h.b16 %v1935
        %v2256 = vunpack.c.l.b16 %v1936
        %v2257 = vunpack.c.h.b16 %v1936
        %v2258 = vunpack.c.l.b16 %v1937
        %v2259 = vunpack.c.h.b16 %v1937
        %v2260 = vunpack.c.l.b16 %v1938
        %v2261 = vunpack.c.h.b16 %v1938
        %v2262 = vunpack.c.l.b16 %v1939
        %v2263 = vunpack.c.h.b16 %v1939
        %v2264 = vunpack.c.l.b16 %v1940
        %v2265 = vunpack.c.h.b16 %v1940
        %v2266 = vunpack.c.l.b16 %v1941
        %v2267 = vunpack.c.h.b16 %v1941
        %v2268 = vunpack.c.l.b16 %v1942
        %v2269 = vunpack.c.h.b16 %v1942
        %v2270 = vunpack.c.l.b16 %v1943
        %v2271 = vunpack.c.h.b16 %v1943
        %v2272 = vunpack.c.l.b16 %v1944
        %v2273 = vunpack.c.h.b16 %v1944
        %v2274 = vunpack.c.l.b16 %v1945
        %v2275 = vunpack.c.h.b16 %v1945
        %v2276 = vunpack.c.l.b16 %v1946
        %v2277 = vunpack.c.h.b16 %v1946
        %v2278 = vunpack.c.l.b16 %v1947
        %v2279 = vunpack.c.h.b16 %v1947
        %v2280 = vunpack.c.l.b16 %v1948
        %v2281 = vunpack.c.h.b16 %v1948
        %v2282 = vunpack.c.l.b16 %v1949
        %v2283 = vunpack.c.h.b16 %v1949
        %v2284 = vunpack.c.l.b16 %v1950
        %v2285 = vunpack.c.h.b16 %v1950
        %v2286 = vunpack.c.l.b16 %v1951
        %v2287 = vunpack.c.h.b16 %v1951
        %v2288 = vunpack.c.l.b16 %v1952
        %v2289 = vunpack.c.h.b16 %v1952
        %v2290 = vunpack.c.l.b16 %v1953
        %v2291 = vunpack.c.h.b16 %v1953
        %v2292 = vunpack.c.l.b16 %v1954
        %v2293 = vunpack.c.h.b16 %v1954
        %v2294 = vunpack.c.l.b16 %v1955
        %v2295 = vunpack.c.h.b16 %v1955
        %v2296 = vunpack.c.l.b16 %v1956
        %v2297 = vunpack.c.h.b16 %v1956
        %v2298 = vunpack.c.l.b16 %v1957
        %v2299 = vunpack.c.h.b16 %v1957
        %v2300 = vunpack.c.l.b16 %v1958
        %v2301 = vunpack.c.h.b16 %v1958
        %v2302 = vunpack.c.l.b16 %v1959
        %v2303 = vunpack.c.h.b16 %v1959
        %v2304 = vunpack.c.l.b16 %v1960
        %v2305 = vunpack.c.h.b16 %v1960
        %v2306 = vunpack.c.l.b16 %v1961
        %v2307 = vunpack.c.h.b16 %v1961
        %v2308 = vunpack.c.l.b16 %v1962
        %v2309 = vunpack.c.h.b16 %v1962
        %v2310 = vunpack.c.l.b16 %v1963
        %v2311 = vunpack.c.h.b16 %v1963
        %v2312 = vunpack.c.l.b16 %v1964
        %v2313 = vunpack.c.h.b16 %v1964
        %v2314 = vunpack.c.l.b16 %v1965
        %v2315 = vunpack.c.h.b16 %v1965
        %v2316 = vunpack.c.l.b16 %v1966
        %v2317 = vunpack.c.h.b16 %v1966
        %v2318 = vunpack.c.l.b16 %v1967
        %v2319 = vunpack.c.h.b16 %v1967
        %v2320 = vunpack.c.l.b16 %v1968
        %v2321 = vunpack.c.h.b16 %v1968
        %v2322 = vunpack.c.l.b16 %v1969
        %v2323 = vunpack.c.h.b16 %v1969
        %v2324 = vunpack.c.l.b16 %v1970
        %v2325 = vunpack.c.h.b16 %v1970
        %v2326 = vunpack.c.l.b16 %v1971
        %v2327 = vunpack.c.h.b16 %v1971
        %v2328 = vunpack.c.l.b16 %v1972
        %v2329 = vunpack.c.h.b16 %v1972
        %v2330 = vunpack.c.l.b16 %v1973
        %v2331 = vunpack.c.h.b16 %v1973
        %v2332 = vunpack.c.l.b16 %v1974
        %v2333 = vunpack.c.h.b16 %v1974
        %v2334 = vunpack.c.l.b16 %v1975
        %v2335 = vunpack.c.h.b16 %v1975
        %v2336 = vunpack.c.l.b16 %v1976
        %v2337 = vunpack.c.h.b16 %v1976
        %v2338 = vunpack.c.l.b16 %v1977
        %v2339 = vunpack.c.h.b16 %v1977
        %v2340 = vunpack.c.l.b16 %v1978
        %v2341 = vunpack.c.h.b16 %v1978
        %v2342 = vunpack.c.l.b16 %v1979
        %v2343 = vunpack.c.h.b16 %v1979
        %v2344 = vunpack.c.l.b16 %v1980
        %v2345 = vunpack.c.h.b16 %v1980
        %v2346 = vunpack.c.l.b16 %v1981
        %v2347 = vunpack.c.h.b16 %v1981
        %v2348 = vunpack.c.l.b16 %v1982
        %v2349 = vunpack.c.h.b16 %v1982
        %v2350 = vunpack.c.l.b16 %v1983
        %v2351 = vunpack.c.h.b16 %v1983
        %v2352 = vunpack.c.l.b16 %v1984
        %v2353 = vunpack.c.h.b16 %v1984
        %v2354 = vunpack.c.l.b16 %v1985
        %v2355 = vunpack.c.h.b16 %v1985
        %v2356 = vunpack.c.l.b16 %v1986
        %v2357 = vunpack.c.h.b16 %v1986
        %v2358 = vunpack.c.l.b16 %v1987
        %v2359 = vunpack.c.h.b16 %v1987
        %v2360 = vunpack.c.l.b16 %v1988
        %v2361 = vunpack.c.h.b16 %v1988
        %v2362 = vunpack.c.l.b16 %v1989
        %v2363 = vunpack.c.h.b16 %v1989
        %v2364 = vunpack.c.l.b16 %v1990
        %v2365 = vunpack.c.h.b16 %v1990
        %v2366 = vunpack.c.l.b16 %v1991
        %v2367 = vunpack.c.h.b16 %v1991
        %v2368 = vunpack.c.l.b16 %v1992
        %v2369 = vunpack.c.h.b16 %v1992
        %v2370 = vunpack.c.l.b16 %v1993
        %v2371 = vunpack.c.h.b16 %v1993
        %v2372 = vunpack.c.l.b16 %v1994
        %v2373 = vunpack.c.h.b16 %v1994
        %v2374 = vunpack.c.l.b16 %v1995
        %v2375 = vunpack.c.h.b16 %v1995
        %v2376 = vunpack.c.l.b16 %v1996
        %v2377 = vunpack.c.h.b16 %v1996
        %v2378 = vunpack.c.l.b16 %v1997
        %v2379 = vunpack.c.h.b16 %v1997
        %v2380 = vunpack.c.l.b16 %v1998
        %v2381 = vunpack.c.h.b16 %v1998
        %v2382 = vunpack.c.l.b16 %v1999
        %v2383 = vunpack.c.h.b16 %v1999
        %v2384 = vunpack.c.l.b16 %v2000
        %v2385 = vunpack.c.h.b16 %v2000
        %v2386 = vunpack.c.l.b16 %v2001
        %v2387 = vunpack.c.h.b16 %v2001
        %v2388 = vunpack.c.l.b16 %v2002
        %v2389 = vunpack.c.h.b16 %v2002
        %v2390 = vunpack.c.l.b16 %v2003
        %v2391 = vunpack.c.h.b16 %v2003
        %v2392 = vunpack.c.l.b16 %v2004
        %v2393 = vunpack.c.h.b16 %v2004
        %v2394 = vunpack.c.l.b16 %v2005
        %v2395 = vunpack.c.h.b16 %v2005
        %v2396 = vunpack.c.l.b16 %v2006
        %v2397 = vunpack.c.h.b16 %v2006
        %v2398 = vunpack.c.l.b16 %v2007
        %v2399 = vunpack.c.h.b16 %v2007
        %v2400 = vunpack.c.l.b16 %v2008
        %v2401 = vunpack.c.h.b16 %v2008
        %v2402 = vunpack.c.l.b16 %v2009
        %v2403 = vunpack.c.h.b16 %v2009
        %v2404 = vpack.c.b16 %v2152, %v2148
        %v2405 = vpack.c.b16 %v2153, %v2149
        %v2406 = vpack.c.b16 %v2154, %v2150
        %v2407 = vpack.c.b16 %v2155, %v2151
        %v2408 = vpack.c.b16 %v2160, %v2156
        %v2409 = vpack.c.b16 %v2161, %v2157
        %v2410 = vpack.c.b16 %v2162, %v2158
        %v2411 = vpack.c.b16 %v2163, %v2159
        %v2412 = vpack.c.b16 %v2168, %v2164
        %v2413 = vpack.c.b16 %v2169, %v2165
        %v2414 = vpack.c.b16 %v2170, %v2166
        %v2415 = vpack.c.b16 %v2171, %v2167
        %v2416 = vpack.c.b16 %v2176, %v2172
        %v2417 = vpack.c.b16 %v2177, %v2173
        %v2418 = vpack.c.b16 %v2178, %v2174
        %v2419 = vpack.c.b16 %v2179, %v2175
        %v2420 = vpack.c.b16 %v2184, %v2180
        %v2421 = vpack.c.b16 %v2185, %v2181
        %v2422 = vpack.c.b16 %v2186, %v2182
        %v2423 = vpack.c.b16 %v2187, %v2183
        %v2424 = vpack.c.b16 %v2192, %v2188
        %v2425 = vpack.c.b16 %v2193, %v2189
        %v2426 = vpack.c.b16 %v2194, %v2190
        %v2427 = vpack.c.b16 %v2195, %v2191
        %v2428 = vpack.c.b16 %v2200, %v2196
        %v2429 = vpack.c.b16 %v2201, %v2197
        %v2430 = vpack.c.b16 %v2202, %v2198
        %v2431 = vpack.c.b16 %v2203, %v2199
        %v2432 = vpack.c.b16 %v2208, %v2204
        %v2433 = vpack.c.b16 %v2209, %v2205
        %v2434 = vpack.c.b16 %v2210, %v2206
        %v2435 = vpack.c.b16 %v2211, %v2207
        %v2436 = vpack.c.b16 %v2216, %v2212
        %v2437 = vpack.c.b16 %v2217, %v2213
        %v2438 = vpack.c.b16 %v2218, %v2214
        %v2439 = vpack.c.b16 %v2219, %v2215
        %v2440 = vpack.c.b16 %v2224, %v2220
        %v2441 = vpack.c.b16 %v2225, %v2221
        %v2442 = vpack.c.b16 %v2226, %v2222
        %v2443 = vpack.c.b16 %v2227, %v2223
        %v2444 = vpack.c.b16 %v2232, %v2228
        %v2445 = vpack.c.b16 %v2233, %v2229
        %v2446 = vpack.c.b16 %v2234, %v2230
        %v2447 = vpack.c.b16 %v2235, %v2231
        %v2448 = vpack.c.b16 %v2240, %v2236
        %v2449 = vpack.c.b16 %v2241, %v2237
        %v2450 = vpack.c.b16 %v2242, %v2238
        %v2451 = vpack.c.b16 %v2243, %v2239
        %v2452 = vpack.c.b16 %v2248, %v2244
        %v2453 = vpack.c.b16 %v2249, %v2245
        %v2454 = vpack.c.b16 %v2250, %v2246
        %v2455 = vpack.c.b16 %v2251, %v2247
        %v2456 = vpack.c.b16 %v2256, %v2252
        %v2457 = vpack.c.b16 %v2257, %v2253
        %v2458 = vpack.c.b16 %v2258, %v2254
        %v2459 = vpack.c.b16 %v2259, %v2255
        %v2460 = vpack.c.b16 %v2264, %v2260
        %v2461 = vpack.c.b16 %v2265, %v2261
        %v2462 = vpack.c.b16 %v2266, %v2262
        %v2463 = vpack.c.b16 %v2267, %v2263
        %v2464 = vpack.c.b16 %v2272, %v2268
        %v2465 = vpack.c.b16 %v2273, %v2269
        %v2466 = vpack.c.b16 %v2274, %v2270
        %v2467 = vpack.c.b16 %v2275, %v2271
        %v2468 = vpack.c.b16 %v2280, %v2276
        %v2469 = vpack.c.b16 %v2281, %v2277
        %v2470 = vpack.c.b16 %v2282, %v2278
        %v2471 = vpack.c.b16 %v2283, %v2279
        %v2472 = vpack.c.b16 %v2288, %v2284
        %v2473 = vpack.c.b16 %v2289, %v2285
        %v2474 = vpack.c.b16 %v2290, %v2286
        %v2475 = vpack.c.b16 %v2291, %v2287
        %v2476 = vpack.c.b16 %v2296, %v2292
        %v2477 = vpack.c.b16 %v2297, %v2293
        %v2478 = vpack.c.b16 %v2298, %v2294
        %v2479 = vpack.c.b16 %v2299, %v2295
        %v2480 = vpack.c.b16 %v2304, %v2300
        %v2481 = vpack.c.b16 %v2305, %v2301
        %v2482 = vpack.c.b16 %v2306, %v2302
        %v2483 = vpack.c.b16 %v2307, %v2303
        %v2484 = vpack.c.b16 %v2312, %v2308
        %v2485 = vpack.c.b16 %v2313, %v2309
        %v2486 = vpack.c.b16 %v2314, %v2310
        %v2487 = vpack.c.b16 %v2315, %v2311
        %v2488 = vpack.c.b16 %v2320, %v2316
        %v2489 = vpack.c.b16 %v2321, %v2317
        %v2490 = vpack.c.b16 %v2322, %v2318
        %v2491 = vpack.c.b16 %v2323, %v2319
        %v2492 = vpack.c.b16 %v2328, %v2324
        %v2493 = vpack.c.b16 %v2329, %v2325
        %v2494 = vpack.c.b16 %v2330, %v2326
        %v2495 = vpack.c.b16 %v2331, %v2327
        %v2496 = vpack.c.b16 %v2336, %v2332
        %v2497 = vpack.c.b16 %v2337, %v2333
        %v2498 = vpack.c.b16 %v2338, %v2334
        %v2499 = vpack.c.b16 %v2339, %v2335
        %v2500 = vpack.c.b16 %v2344, %v2340
        %v2501 = vpack.c.b16 %v2345, %v2341
        %v2502 = vpack.c.b16 %v2346, %v2342
        %v2503 = vpack.c.b16 %v2347, %v2343
        %v2504 = vpack.c.b16 %v2352, %v2348
        %v2505 = vpack.c.b16 %v2353, %v2349
        %v2506 = vpack.c.b16 %v2354, %v2350
        %v2507 = vpack.c.b16 %v2355, %v2351
        %v2508 = vpack.c.b16 %v2360, %v2356
        %v2509 = vpack.c.b16 %v2361, %v2357
        %v2510 = vpack.c.b16 %v2362, %v2358
        %v2511 = vpack.c.b16 %v2363, %v2359
        %v2512 = vpack.c.b16 %v2368, %v2364
        %v2513 = vpack.c.b16 %v2369, %v2365
        %v2514 = vpack.c.b16 %v2370, %v2366
        %v2515 = vpack.c.b16 %v2371, %v2367
        %v2516 = vpack.c.b16 %v2376, %v2372
        %v2517 = vpack.c.b16 %v2377, %v2373
        %v2518 = vpack.c.b16 %v2378, %v2374
        %v2519 = vpack.c.b16 %v2379, %v2375
        %v2520 = vpack.c.b16 %v2384, %v2380
        %v2521 = vpack.c.b16 %v2385, %v2381
        %v2522 = vpack.c.b16 %v2386, %v2382
        %v2523 = vpack.c.b16 %v2387, %v2383
        %v2524 = vpack.c.b16 %v2392, %v2388
        %v2525 = vpack.c.b16 %v2393, %v2389
        %v2526 = vpack.c.b16 %v2394, %v2390
        %v2527 = vpack.c.b16 %v2395, %v2391
        %v2528 = vpack.c.b16 %v2400, %v2396
        %v2529 = vpack.c.b16 %v2401, %v2397
        %v2530 = vpack.c.b16 %v2402, %v2398
        %v2531 = vpack.c.b16 %v2403, %v2399
        %2660 = vmatpush.bf16.msra.mxu0 %v2432
        %2661 = vmatpush.bf16.msra.mxu0 %v2428
        %2662 = vmatpush.bf16.msra.mxu0 %v2424
        %2663 = vmatpush.bf16.msra.mxu0 %v2420
        %2664 = vmatpush.bf16.msra.mxu0 %v2416
        %2665 = vmatpush.bf16.msra.mxu0 %v2412
        %2666 = vmatpush.bf16.msra.mxu0 %v2408
        %2667 = vmatpush.bf16.msra.mxu0 %v2404
        %2668 = vmatmul.bf16.gmra.mxu0 %v1878
        %v2669 = vpop.f32.mrf.mxu0
        %v2670 = vadd.f32 %v2012, %v2669
        %v2671 = vpop.f32.mrf.mxu0
        %2672 = vdwg.mxu0
        %2673 = vmatpush.bf16.msra.mxu0 %v2464
        %2674 = vmatpush.bf16.msra.mxu0 %v2460
        %2675 = vmatpush.bf16.msra.mxu0 %v2456
        %2676 = vmatpush.bf16.msra.mxu0 %v2452
        %2677 = vmatpush.bf16.msra.mxu0 %v2448
        %2678 = vmatpush.bf16.msra.mxu0 %v2444
        %2679 = vmatpush.bf16.msra.mxu0 %v2440
        %2680 = vmatpush.bf16.msra.mxu0 %v2436
        %2681 = vmatmul.bf16.gmra.mxu0 %v1879
        %v2682 = vpop.f32.mrf.mxu0
        %v2683 = vadd.f32 %v2670, %v2682
        %v2684 = vpop.f32.mrf.mxu0
        %2685 = vdwg.mxu0
        %2686 = vmatpush.bf16.msra.mxu0 %v2496
        %2687 = vmatpush.bf16.msra.mxu0 %v2492
        %2688 = vmatpush.bf16.msra.mxu0 %v2488
        %2689 = vmatpush.bf16.msra.mxu0 %v2484
        %2690 = vmatpush.bf16.msra.mxu0 %v2480
        %2691 = vmatpush.bf16.msra.mxu0 %v2476
        %2692 = vmatpush.bf16.msra.mxu0 %v2472
        %2693 = vmatpush.bf16.msra.mxu0 %v2468
        %2694 = vmatmul.bf16.gmra.mxu0 %v1880
        %v2695 = vpop.f32.mrf.mxu0
        %v2696 = vadd.f32 %v2683, %v2695
        %v2697 = vpop.f32.mrf.mxu0
        %2698 = vdwg.mxu0
        %2699 = vmatpush.bf16.msra.mxu0 %v2528
        %2700 = vmatpush.bf16.msra.mxu0 %v2524
        %2701 = vmatpush.bf16.msra.mxu0 %v2520
        %2702 = vmatpush.bf16.msra.mxu0 %v2516
        %2703 = vmatpush.bf16.msra.mxu0 %v2512
        %2704 = vmatpush.bf16.msra.mxu0 %v2508
        %2705 = vmatpush.bf16.msra.mxu0 %v2504
        %2706 = vmatpush.bf16.msra.mxu0 %v2500
        %2707 = vmatmul.bf16.gmra.mxu0 %v1881
        %v2708 = vpop.f32.mrf.mxu0
        %v2709 = vadd.f32 %v2696, %v2708
        %v2710 = vpop.f32.mrf.mxu0
        %2711 = vdwg.mxu0
        %2712 = vmatpush.bf16.msra.mxu0 %v2433
        %2713 = vmatpush.bf16.msra.mxu0 %v2429
        %2714 = vmatpush.bf16.msra.mxu0 %v2425
        %2715 = vmatpush.bf16.msra.mxu0 %v2421
        %2716 = vmatpush.bf16.msra.mxu0 %v2417
        %2717 = vmatpush.bf16.msra.mxu0 %v2413
        %2718 = vmatpush.bf16.msra.mxu0 %v2409
        %2719 = vmatpush.bf16.msra.mxu0 %v2405
        %2720 = vmatmul.bf16.gmra.mxu0 %v1878
        %v2721 = vpop.f32.mrf.mxu0
        %v2722 = vadd.f32 %v2013, %v2721
        %v2723 = vpop.f32.mrf.mxu0
        %2724 = vdwg.mxu0
        %2725 = vmatpush.bf16.msra.mxu0 %v2465
        %2726 = vmatpush.bf16.msra.mxu0 %v2461
        %2727 = vmatpush.bf16.msra.mxu0 %v2457
        %2728 = vmatpush.bf16.msra.mxu0 %v2453
        %2729 = vmatpush.bf16.msra.mxu0 %v2449
        %2730 = vmatpush.bf16.msra.mxu0 %v2445
        %2731 = vmatpush.bf16.msra.mxu0 %v2441
        %2732 = vmatpush.bf16.msra.mxu0 %v2437
        %2733 = vmatmul.bf16.gmra.mxu0 %v1879
        %v2734 = vpop.f32.mrf.mxu0
        %v2735 = vadd.f32 %v2722, %v2734
        %v2736 = vpop.f32.mrf.mxu0
        %2737 = vdwg.mxu0
        %2738 = vmatpush.bf16.msra.mxu0 %v2497
        %2739 = vmatpush.bf16.msra.mxu0 %v2493
        %2740 = vmatpush.bf16.msra.mxu0 %v2489
        %2741 = vmatpush.bf16.msra.mxu0 %v2485
        %2742 = vmatpush.bf16.msra.mxu0 %v2481
        %2743 = vmatpush.bf16.msra.mxu0 %v2477
        %2744 = vmatpush.bf16.msra.mxu0 %v2473
        %2745 = vmatpush.bf16.msra.mxu0 %v2469
        %2746 = vmatmul.bf16.gmra.mxu0 %v1880
        %v2747 = vpop.f32.mrf.mxu0
        %v2748 = vadd.f32 %v2735, %v2747
        %v2749 = vpop.f32.mrf.mxu0
        %2750 = vdwg.mxu0
        %2751 = vmatpush.bf16.msra.mxu0 %v2529
        %2752 = vmatpush.bf16.msra.mxu0 %v2525
        %2753 = vmatpush.bf16.msra.mxu0 %v2521
        %2754 = vmatpush.bf16.msra.mxu0 %v2517
        %2755 = vmatpush.bf16.msra.mxu0 %v2513
        %2756 = vmatpush.bf16.msra.mxu0 %v2509
        %2757 = vmatpush.bf16.msra.mxu0 %v2505
        %2758 = vmatpush.bf16.msra.mxu0 %v2501
        %2759 = vmatmul.bf16.gmra.mxu0 %v1881
        %v2760 = vpop.f32.mrf.mxu0
        %v2761 = vadd.f32 %v2748, %v2760
        %v2762 = vpop.f32.mrf.mxu0
        %2763 = vdwg.mxu0
        %2764 = vmatpush.bf16.msra.mxu0 %v2434
        %2765 = vmatpush.bf16.msra.mxu0 %v2430
        %2766 = vmatpush.bf16.msra.mxu0 %v2426
        %2767 = vmatpush.bf16.msra.mxu0 %v2422
        %2768 = vmatpush.bf16.msra.mxu0 %v2418
        %2769 = vmatpush.bf16.msra.mxu0 %v2414
        %2770 = vmatpush.bf16.msra.mxu0 %v2410
        %2771 = vmatpush.bf16.msra.mxu0 %v2406
        %2772 = vmatmul.bf16.gmra.mxu0 %v1878
        %v2773 = vpop.f32.mrf.mxu0
        %v2774 = vadd.f32 %v2014, %v2773
        %v2775 = vpop.f32.mrf.mxu0
        %2776 = vdwg.mxu0
        %2777 = vmatpush.bf16.msra.mxu0 %v2466
        %2778 = vmatpush.bf16.msra.mxu0 %v2462
        %2779 = vmatpush.bf16.msra.mxu0 %v2458
        %2780 = vmatpush.bf16.msra.mxu0 %v2454
        %2781 = vmatpush.bf16.msra.mxu0 %v2450
        %2782 = vmatpush.bf16.msra.mxu0 %v2446
        %2783 = vmatpush.bf16.msra.mxu0 %v2442
        %2784 = vmatpush.bf16.msra.mxu0 %v2438
        %2785 = vmatmul.bf16.gmra.mxu0 %v1879
        %v2786 = vpop.f32.mrf.mxu0
        %v2787 = vadd.f32 %v2774, %v2786
        %v2788 = vpop.f32.mrf.mxu0
        %2789 = vdwg.mxu0
        %2790 = vmatpush.bf16.msra.mxu0 %v2498
        %2791 = vmatpush.bf16.msra.mxu0 %v2494
        %2792 = vmatpush.bf16.msra.mxu0 %v2490
        %2793 = vmatpush.bf16.msra.mxu0 %v2486
        %2794 = vmatpush.bf16.msra.mxu0 %v2482
        %2795 = vmatpush.bf16.msra.mxu0 %v2478
        %2796 = vmatpush.bf16.msra.mxu0 %v2474
        %2797 = vmatpush.bf16.msra.mxu0 %v2470
        %2798 = vmatmul.bf16.gmra.mxu0 %v1880
        %v2799 = vpop.f32.mrf.mxu0
        %v2800 = vadd.f32 %v2787, %v2799
        %v2801 = vpop.f32.mrf.mxu0
        %2802 = vdwg.mxu0
        %2803 = vmatpush.bf16.msra.mxu0 %v2530
        %2804 = vmatpush.bf16.msra.mxu0 %v2526
        %2805 = vmatpush.bf16.msra.mxu0 %v2522
        %2806 = vmatpush.bf16.msra.mxu0 %v2518
        %2807 = vmatpush.bf16.msra.mxu0 %v2514
        %2808 = vmatpush.bf16.msra.mxu0 %v2510
        %2809 = vmatpush.bf16.msra.mxu0 %v2506
        %2810 = vmatpush.bf16.msra.mxu0 %v2502
        %2811 = vmatmul.bf16.gmra.mxu0 %v1881
        %v2812 = vpop.f32.mrf.mxu0
        %v2813 = vadd.f32 %v2800, %v2812
        %v2814 = vpop.f32.mrf.mxu0
        %2815 = vdwg.mxu0
        %2816 = vmatpush.bf16.msra.mxu0 %v2435
        %2817 = vmatpush.bf16.msra.mxu0 %v2431
        %2818 = vmatpush.bf16.msra.mxu0 %v2427
        %2819 = vmatpush.bf16.msra.mxu0 %v2423
        %2820 = vmatpush.bf16.msra.mxu0 %v2419
        %2821 = vmatpush.bf16.msra.mxu0 %v2415
        %2822 = vmatpush.bf16.msra.mxu0 %v2411
        %2823 = vmatpush.bf16.msra.mxu0 %v2407
        %2824 = vmatmul.bf16.gmra.mxu0 %v1878
        %v2825 = vpop.f32.mrf.mxu0
        %v2826 = vadd.f32 %v2015, %v2825
        %v2827 = vpop.f32.mrf.mxu0
        %2828 = vdwg.mxu0
        %2829 = vmatpush.bf16.msra.mxu0 %v2467
        %2830 = vmatpush.bf16.msra.mxu0 %v2463
        %2831 = vmatpush.bf16.msra.mxu0 %v2459
        %2832 = vmatpush.bf16.msra.mxu0 %v2455
        %2833 = vmatpush.bf16.msra.mxu0 %v2451
        %2834 = vmatpush.bf16.msra.mxu0 %v2447
        %2835 = vmatpush.bf16.msra.mxu0 %v2443
        %2836 = vmatpush.bf16.msra.mxu0 %v2439
        %2837 = vmatmul.bf16.gmra.mxu0 %v1879
        %v2838 = vpop.f32.mrf.mxu0
        %v2839 = vadd.f32 %v2826, %v2838
        %v2840 = vpop.f32.mrf.mxu0
        %2841 = vdwg.mxu0
        %2842 = vmatpush.bf16.msra.mxu0 %v2499
        %2843 = vmatpush.bf16.msra.mxu0 %v2495
        %2844 = vmatpush.bf16.msra.mxu0 %v2491
        %2845 = vmatpush.bf16.msra.mxu0 %v2487
        %2846 = vmatpush.bf16.msra.mxu0 %v2483
        %2847 = vmatpush.bf16.msra.mxu0 %v2479
        %2848 = vmatpush.bf16.msra.mxu0 %v2475
        %2849 = vmatpush.bf16.msra.mxu0 %v2471
        %2850 = vmatmul.bf16.gmra.mxu0 %v1880
        %v2851 = vpop.f32.mrf.mxu0
        %v2852 = vadd.f32 %v2839, %v2851
        %v2853 = vpop.f32.mrf.mxu0
        %2854 = vdwg.mxu0
        %2855 = vmatpush.bf16.msra.mxu0 %v2531
        %2856 = vmatpush.bf16.msra.mxu0 %v2527
        %2857 = vmatpush.bf16.msra.mxu0 %v2523
        %2858 = vmatpush.bf16.msra.mxu0 %v2519
        %2859 = vmatpush.bf16.msra.mxu0 %v2515
        %2860 = vmatpush.bf16.msra.mxu0 %v2511
        %2861 = vmatpush.bf16.msra.mxu0 %v2507
        %2862 = vmatpush.bf16.msra.mxu0 %v2503
        %2863 = vmatmul.bf16.gmra.mxu0 %v1881
        %v2864 = vpop.f32.mrf.mxu0
        %v2865 = vadd.f32 %v2852, %v2864
        %v2866 = vpop.f32.mrf.mxu0
        %2867 = vdwg.mxu0
        %v2868 = vmax.f32 %v2709, 0.0
        %v2869 = vmax.f32 %v2761, 0.0
        %v2870 = vmax.f32 %v2813, 0.0
        %v2871 = vmax.f32 %v2865, 0.0
        %v2872 = vpack.c.bf16 %v2868, %v2868
        %v2873 = vpack.c.bf16 %v2869, %v2869
        %v2874 = vpack.c.bf16 %v2870, %v2870
        %v2875 = vpack.c.bf16 %v2871, %v2871
        %v2876 = vld [vmem:[#allocation11] sm:$0xf]
        %v2877 = vld [vmem:[#allocation11 + $0x4] sm:$0xf]
        %v2878 = vld [vmem:[#allocation11 + $0x8] sm:$0xf]
        %v2879 = vld [vmem:[#allocation11 + $0xc] sm:$0xf]
        %v2880 = vld [vmem:[#allocation11 + $0x10] sm:$0xf]
        %v2881 = vld [vmem:[#allocation11 + $0x14] sm:$0xf]
        %v2882 = vld [vmem:[#allocation11 + $0x18] sm:$0xf]
        %v2883 = vld [vmem:[#allocation11 + $0x1c] sm:$0xf]
        %v2884 = vld [vmem:[#allocation11 + $0x20] sm:$0xf]
        %v2885 = vld [vmem:[#allocation11 + $0x24] sm:$0xf]
        %v2886 = vld [vmem:[#allocation11 + $0x28] sm:$0xf]
        %v2887 = vld [vmem:[#allocation11 + $0x2c] sm:$0xf]
        %v2888 = vld [vmem:[#allocation11 + $0x30] sm:$0xf]
        %v2889 = vld [vmem:[#allocation11 + $0x34] sm:$0xf]
        %v2890 = vld [vmem:[#allocation11 + $0x38] sm:$0xf]
        %v2891 = vld [vmem:[#allocation11 + $0x3c] sm:$0xf]
        %v2892 = vld [vmem:[#allocation11 + $0x40] sm:$0xf]
        %v2893 = vld [vmem:[#allocation11 + $0x44] sm:$0xf]
        %v2894 = vld [vmem:[#allocation11 + $0x48] sm:$0xf]
        %v2895 = vld [vmem:[#allocation11 + $0x4c] sm:$0xf]
        %v2896 = vld [vmem:[#allocation11 + $0x50] sm:$0xf]
        %v2897 = vld [vmem:[#allocation11 + $0x54] sm:$0xf]
        %v2898 = vld [vmem:[#allocation11 + $0x58] sm:$0xf]
        %v2899 = vld [vmem:[#allocation11 + $0x5c] sm:$0xf]
        %v2900 = vld [vmem:[#allocation11 + $0x60] sm:$0xf]
        %v2901 = vld [vmem:[#allocation11 + $0x64] sm:$0xf]
        %v2902 = vld [vmem:[#allocation11 + $0x68] sm:$0xf]
        %v2903 = vld [vmem:[#allocation11 + $0x6c] sm:$0xf]
        %v2904 = vld [vmem:[#allocation11 + $0x70] sm:$0xf]
        %v2905 = vld [vmem:[#allocation11 + $0x74] sm:$0xf]
        %v2906 = vld [vmem:[#allocation11 + $0x78] sm:$0xf]
        %v2907 = vld [vmem:[#allocation11 + $0x7c] sm:$0xf]
        %v2908 = vld [vmem:[#allocation11 + $0x80] sm:$0xf]
        %v2909 = vld [vmem:[#allocation11 + $0x84] sm:$0xf]
        %v2910 = vld [vmem:[#allocation11 + $0x88] sm:$0xf]
        %v2911 = vld [vmem:[#allocation11 + $0x8c] sm:$0xf]
        %v2912 = vld [vmem:[#allocation11 + $0x90] sm:$0xf]
        %v2913 = vld [vmem:[#allocation11 + $0x94] sm:$0xf]
        %v2914 = vld [vmem:[#allocation11 + $0x98] sm:$0xf]
        %v2915 = vld [vmem:[#allocation11 + $0x9c] sm:$0xf]
        %v2916 = vld [vmem:[#allocation11 + $0xa0] sm:$0xf]
        %v2917 = vld [vmem:[#allocation11 + $0xa4] sm:$0xf]
        %v2918 = vld [vmem:[#allocation11 + $0xa8] sm:$0xf]
        %v2919 = vld [vmem:[#allocation11 + $0xac] sm:$0xf]
        %v2920 = vld [vmem:[#allocation11 + $0xb0] sm:$0xf]
        %v2921 = vld [vmem:[#allocation11 + $0xb4] sm:$0xf]
        %v2922 = vld [vmem:[#allocation11 + $0xb8] sm:$0xf]
        %v2923 = vld [vmem:[#allocation11 + $0xbc] sm:$0xf]
        %v2924 = vld [vmem:[#allocation11 + $0xc0] sm:$0xf]
        %v2925 = vld [vmem:[#allocation11 + $0xc4] sm:$0xf]
        %v2926 = vld [vmem:[#allocation11 + $0xc8] sm:$0xf]
        %v2927 = vld [vmem:[#allocation11 + $0xcc] sm:$0xf]
        %v2928 = vld [vmem:[#allocation11 + $0xd0] sm:$0xf]
        %v2929 = vld [vmem:[#allocation11 + $0xd4] sm:$0xf]
        %v2930 = vld [vmem:[#allocation11 + $0xd8] sm:$0xf]
        %v2931 = vld [vmem:[#allocation11 + $0xdc] sm:$0xf]
        %v2932 = vld [vmem:[#allocation11 + $0xe0] sm:$0xf]
        %v2933 = vld [vmem:[#allocation11 + $0xe4] sm:$0xf]
        %v2934 = vld [vmem:[#allocation11 + $0xe8] sm:$0xf]
        %v2935 = vld [vmem:[#allocation11 + $0xec] sm:$0xf]
        %v2936 = vld [vmem:[#allocation11 + $0xf0] sm:$0xf]
        %v2937 = vld [vmem:[#allocation11 + $0xf4] sm:$0xf]
        %v2938 = vld [vmem:[#allocation11 + $0xf8] sm:$0xf]
        %v2939 = vld [vmem:[#allocation11 + $0xfc] sm:$0xf]
        %v2940 = vld [vmem:[%s6] sm:$0x1]
        %v2942 = vperm.slane %v2940, 0
        %v3008 = vunpack.c.l.b16 %v2876
        %v3009 = vunpack.c.l.b16 %v2877
        %v3010 = vunpack.c.l.b16 %v2878
        %v3011 = vunpack.c.l.b16 %v2879
        %v3012 = vunpack.c.l.b16 %v2880
        %v3013 = vunpack.c.l.b16 %v2881
        %v3014 = vunpack.c.l.b16 %v2882
        %v3015 = vunpack.c.l.b16 %v2883
        %v3016 = vunpack.c.l.b16 %v2884
        %v3017 = vunpack.c.l.b16 %v2885
        %v3018 = vunpack.c.l.b16 %v2886
        %v3019 = vunpack.c.l.b16 %v2887
        %v3020 = vunpack.c.l.b16 %v2888
        %v3021 = vunpack.c.l.b16 %v2889
        %v3022 = vunpack.c.l.b16 %v2890
        %v3023 = vunpack.c.l.b16 %v2891
        %v3024 = vunpack.c.l.b16 %v2892
        %v3025 = vunpack.c.l.b16 %v2893
        %v3026 = vunpack.c.l.b16 %v2894
        %v3027 = vunpack.c.l.b16 %v2895
        %v3028 = vunpack.c.l.b16 %v2896
        %v3029 = vunpack.c.l.b16 %v2897
        %v3030 = vunpack.c.l.b16 %v2898
        %v3031 = vunpack.c.l.b16 %v2899
        %v3032 = vunpack.c.l.b16 %v2900
        %v3033 = vunpack.c.l.b16 %v2901
        %v3034 = vunpack.c.l.b16 %v2902
        %v3035 = vunpack.c.l.b16 %v2903
        %v3036 = vunpack.c.l.b16 %v2904
        %v3037 = vunpack.c.l.b16 %v2905
        %v3038 = vunpack.c.l.b16 %v2906
        %v3039 = vunpack.c.l.b16 %v2907
        %v3040 = vunpack.c.l.b16 %v2908
        %v3041 = vunpack.c.l.b16 %v2909
        %v3042 = vunpack.c.l.b16 %v2910
        %v3043 = vunpack.c.l.b16 %v2911
        %v3044 = vunpack.c.l.b16 %v2912
        %v3045 = vunpack.c.l.b16 %v2913
        %v3046 = vunpack.c.l.b16 %v2914
        %v3047 = vunpack.c.l.b16 %v2915
        %v3048 = vunpack.c.l.b16 %v2916
        %v3049 = vunpack.c.l.b16 %v2917
        %v3050 = vunpack.c.l.b16 %v2918
        %v3051 = vunpack.c.l.b16 %v2919
        %v3052 = vunpack.c.l.b16 %v2920
        %v3053 = vunpack.c.l.b16 %v2921
        %v3054 = vunpack.c.l.b16 %v2922
        %v3055 = vunpack.c.l.b16 %v2923
        %v3056 = vunpack.c.l.b16 %v2924
        %v3057 = vunpack.c.l.b16 %v2925
        %v3058 = vunpack.c.l.b16 %v2926
        %v3059 = vunpack.c.l.b16 %v2927
        %v3060 = vunpack.c.l.b16 %v2928
        %v3061 = vunpack.c.l.b16 %v2929
        %v3062 = vunpack.c.l.b16 %v2930
        %v3063 = vunpack.c.l.b16 %v2931
        %v3064 = vunpack.c.l.b16 %v2932
        %v3065 = vunpack.c.l.b16 %v2933
        %v3066 = vunpack.c.l.b16 %v2934
        %v3067 = vunpack.c.l.b16 %v2935
        %v3068 = vunpack.c.l.b16 %v2936
        %v3069 = vunpack.c.l.b16 %v2937
        %v3070 = vunpack.c.l.b16 %v2938
        %v3071 = vunpack.c.l.b16 %v2939
        %v3072 = vpack.c.b16 %v3009, %v3008
        %v3073 = vpack.c.b16 %v3011, %v3010
        %v3074 = vpack.c.b16 %v3013, %v3012
        %v3075 = vpack.c.b16 %v3015, %v3014
        %v3076 = vpack.c.b16 %v3017, %v3016
        %v3077 = vpack.c.b16 %v3019, %v3018
        %v3078 = vpack.c.b16 %v3021, %v3020
        %v3079 = vpack.c.b16 %v3023, %v3022
        %v3080 = vpack.c.b16 %v3025, %v3024
        %v3081 = vpack.c.b16 %v3027, %v3026
        %v3082 = vpack.c.b16 %v3029, %v3028
        %v3083 = vpack.c.b16 %v3031, %v3030
        %v3084 = vpack.c.b16 %v3033, %v3032
        %v3085 = vpack.c.b16 %v3035, %v3034
        %v3086 = vpack.c.b16 %v3037, %v3036
        %v3087 = vpack.c.b16 %v3039, %v3038
        %v3088 = vpack.c.b16 %v3041, %v3040
        %v3089 = vpack.c.b16 %v3043, %v3042
        %v3090 = vpack.c.b16 %v3045, %v3044
        %v3091 = vpack.c.b16 %v3047, %v3046
        %v3092 = vpack.c.b16 %v3049, %v3048
        %v3093 = vpack.c.b16 %v3051, %v3050
        %v3094 = vpack.c.b16 %v3053, %v3052
        %v3095 = vpack.c.b16 %v3055, %v3054
        %v3096 = vpack.c.b16 %v3057, %v3056
        %v3097 = vpack.c.b16 %v3059, %v3058
        %v3098 = vpack.c.b16 %v3061, %v3060
        %v3099 = vpack.c.b16 %v3063, %v3062
        %v3100 = vpack.c.b16 %v3065, %v3064
        %v3101 = vpack.c.b16 %v3067, %v3066
        %v3102 = vpack.c.b16 %v3069, %v3068
        %v3103 = vpack.c.b16 %v3071, %v3070
        %3136 = vmatpush.bf16.msra.mxu0 %v3079
        %3137 = vmatpush.bf16.msra.mxu0 %v3078
        %3138 = vmatpush.bf16.msra.mxu0 %v3077
        %3139 = vmatpush.bf16.msra.mxu0 %v3076
        %3140 = vmatpush.bf16.msra.mxu0 %v3075
        %3141 = vmatpush.bf16.msra.mxu0 %v3074
        %3142 = vmatpush.bf16.msra.mxu0 %v3073
        %3143 = vmatpush.bf16.msra.mxu0 %v3072
        %3144 = vmatmul.bf16.gmra.mxu0 %v2872
        %v3145 = vpop.f32.mrf.mxu0
        %v3146 = vadd.f32 %v2942, %v3145
        %v3147 = vpop.f32.mrf.mxu0
        %3148 = vdwg.mxu0
        %3149 = vmatpush.bf16.msra.mxu0 %v3087
        %3150 = vmatpush.bf16.msra.mxu0 %v3086
        %3151 = vmatpush.bf16.msra.mxu0 %v3085
        %3152 = vmatpush.bf16.msra.mxu0 %v3084
        %3153 = vmatpush.bf16.msra.mxu0 %v3083
        %3154 = vmatpush.bf16.msra.mxu0 %v3082
        %3155 = vmatpush.bf16.msra.mxu0 %v3081
        %3156 = vmatpush.bf16.msra.mxu0 %v3080
        %3157 = vmatmul.bf16.gmra.mxu0 %v2873
        %v3158 = vpop.f32.mrf.mxu0
        %v3159 = vadd.f32 %v3146, %v3158
        %v3160 = vpop.f32.mrf.mxu0
        %3161 = vdwg.mxu0
        %3162 = vmatpush.bf16.msra.mxu0 %v3095
        %3163 = vmatpush.bf16.msra.mxu0 %v3094
        %3164 = vmatpush.bf16.msra.mxu0 %v3093
        %3165 = vmatpush.bf16.msra.mxu0 %v3092
        %3166 = vmatpush.bf16.msra.mxu0 %v3091
        %3167 = vmatpush.bf16.msra.mxu0 %v3090
        %3168 = vmatpush.bf16.msra.mxu0 %v3089
        %3169 = vmatpush.bf16.msra.mxu0 %v3088
        %3170 = vmatmul.bf16.gmra.mxu0 %v2874
        %v3171 = vpop.f32.mrf.mxu0
        %v3172 = vadd.f32 %v3159, %v3171
        %v3173 = vpop.f32.mrf.mxu0
        %3174 = vdwg.mxu0
        %3175 = vmatpush.bf16.msra.mxu0 %v3103
        %3176 = vmatpush.bf16.msra.mxu0 %v3102
        %3177 = vmatpush.bf16.msra.mxu0 %v3101
        %3178 = vmatpush.bf16.msra.mxu0 %v3100
        %3179 = vmatpush.bf16.msra.mxu0 %v3099
        %3180 = vmatpush.bf16.msra.mxu0 %v3098
        %3181 = vmatpush.bf16.msra.mxu0 %v3097
        %3182 = vmatpush.bf16.msra.mxu0 %v3096
        %3183 = vmatmul.bf16.gmra.mxu0 %v2875
        %v3184 = vpop.f32.mrf.mxu0
        %v3185 = vadd.f32 %v3172, %v3184
        %v3186 = vpop.f32.mrf.mxu0
        %3187 = vdwg.mxu0
        %v3188 = vmax.f32 %v3185, 0.0
        %v3189 = vpack.c.bf16 %v3188, %v3188
        %3190 = vst [vmem:[%s375] sm:$0xf] %v3189
        %s3191 = sand.u32 %s187, 1
        %s3192 = scalar_lea.sflag [#allocation4], %s3191
        %s3193 = sand.u32 %s187, 1
        %s3194 = smul.addr %s3193, 4
        %s3195 = scalar_lea.vmem [#allocation13], %s3194
        // Predicated region
        $region73: #{tpu_custom_call.1} parent=47 // pred_check
          %p3196 = pneg %p197
        $region74: #{tpu_custom_call.1} parent=47 // pred_check_branch
          %3198 = sbr.rel (%p3196) target = $region76
        $region75: #{tpu_custom_call.1} parent=47 // pred_region
          %3200 = vsyncadd %s3192, 0
          %s3201 = smul.addr %s27, 4
          %s3202 = scalar_lea.hbm %s7, %s3201
          %s3204 = sshll.u32 %s3195, 4
          %s3205 = int_to_ptr.vmem [resolvable:$true] %s3204
          %s3206 = sshll.u32 %s3202, 4
          %s3207 = int_to_ptr.hbm [resolvable:$true] %s3206
          %3209 = dma.vmem_to_hbm [thread:$0]  %s3205, 64, %s3207, %s3192
        $region76: #{tpu_custom_call.1} parent=47 // pred_fallthru
          _
      $region48: #{tpu_custom_call.1} parent=5 // pred_fallthru
        _
      %p3210 = scmp.le.s32.totalorder 2, %s22
      // Predicated region
      $region77: #{tpu_custom_call.1} parent=5 // pred_check
        %p3211 = pneg %p3210
      $region78: #{tpu_custom_call.1} parent=5 // pred_check_branch
        %3213 = sbr.rel (%p3211) target = $region80
      $region79: #{tpu_custom_call.1} parent=5 // pred_region
        %s3214 = ssub.s32 %s22, 2
        // Predicated region
        $region81: #{tpu_custom_call.1} parent=79 // pred_check
          %p3215 = pneg %p203
        $region82: #{tpu_custom_call.1} parent=79 // pred_check_branch
          %3217 = sbr.rel (%p3215) target = $region84
        $region83: #{tpu_custom_call.1} parent=79 // pred_region
          %s3218 = sand.u32 %s188, 1
          %s3219 = scalar_lea.sflag [#allocation4], %s3218
          %s3220 = sand.u32 %s188, 1
          %s3221 = smul.addr %s3220, 4
          %s3222 = scalar_lea.vmem [#allocation13], %s3221
          %3224 = dma.done %s3219, 64
        $region84: #{tpu_custom_call.1} parent=79 // pred_fallthru
          _
      $region80: #{tpu_custom_call.1} parent=5 // pred_fallthru
        _
    $region6: #{tpu_custom_call.1} parent=1 // loop_footer
      %s26 = sadd.s32 1, %s22
    $region7: #{tpu_custom_call.1} parent=1 // loop_footer_branch
      %21 = sbr.rel target = $region3
    $region8: #{tpu_custom_call.1} parent=1 // loop_exit
      _
    %3225 = vsyncpa [#allocation3], 1
    %s3226 = scalar_lea.sflag [#allocation3], 1
    %3227 = vsyncpa %s3226, 1
    %3228 = vsyncpa [#allocation6], 1
    %3229 = vsyncpa [#allocation9], 1
    %3230 = vsyncpa [#allocation12], 1
    %3231 = vsyncpa [#allocation4], 1
    %s3232 = scalar_lea.sflag [#allocation4], 1
    %3233 = vsyncpa %s3232, 1

</llo_original>
